<compile_context>
chip_gen: v7x
topology: tpu7x:2x2x1
jax: 0.10.0
libtpu: 0.0.40
codegen_flags: <defaults>
</compile_context>

<pallas_src>
import jax
import jax.numpy as jnp
from jax import lax
from jax.experimental import pallas as pl
from jax.experimental.pallas import tpu as pltpu

HIDDEN = 256


def actor_kernel(x_ref, w1_ref, b1_ref, w2_ref, b2_ref, w3_ref, b3_ref, o_ref):
    """Fused 3-layer MLP: leaky_relu -> leaky_relu -> tanh, all f32."""
    neg_slope = jnp.float32(0.01)  # F.leaky_relu default
    prec = lax.Precision.HIGHEST   # full-f32 MXU passes (matches f32 reference)

    x = x_ref[...]

    # fc1 + leaky_relu
    h1 = jnp.dot(x, w1_ref[...], preferred_element_type=jnp.float32,
                 precision=prec) + b1_ref[...]
    h1 = jnp.maximum(h1, neg_slope * h1)

    # fc2 + leaky_relu
    h2 = jnp.dot(h1, w2_ref[...], preferred_element_type=jnp.float32,
                 precision=prec) + b2_ref[...]
    h2 = jnp.maximum(h2, neg_slope * h2)

    # act (output head, compact action_size lanes) + tanh
    out = jnp.dot(h2, w3_ref[...], preferred_element_type=jnp.float32,
                  precision=prec) + b3_ref[...]
    o_ref[...] = jnp.tanh(out).astype(o_ref.dtype)


def actor_forward(state, params, *, batch_tile=256):
    """state: (B, state_size) f32. params: dict of f32 weights/biases.

    No per-call weight preprocessing: weights/biases are passed to the kernel
    exactly as stored (f32, compact shapes) and held VMEM-resident across the
    batch grid. batch_tile: 128 recommended on v5e, 256 (default) on v6e/v7x;
    halve it on v7x when B <= batch_tile so both TensorCores get a grid step.
    """
    B, state_size = state.shape
    hidden = params["w1"].shape[1]
    action_size = params["w3"].shape[1]

    # Balanced batch tiling: pad at most to the next sublane group (8), then
    # split into near-equal tiles instead of padding up to a full batch_tile.
    b_pad8 = max(8, pl.cdiv(B, 8) * 8)
    n_tiles = pl.cdiv(b_pad8, batch_tile)
    tb = pl.cdiv(pl.cdiv(b_pad8, n_tiles), 8) * 8
    b_pad = n_tiles * tb
    if b_pad != B:
        state_p = jnp.zeros((b_pad, state_size), state.dtype).at[:B].set(state)
    else:
        state_p = state

    grid = (n_tiles,)

    # Advisory cost for XLA scheduling around this (latency-bound at small B)
    # custom call.
    flops = 2 * b_pad * (state_size * hidden + hidden * hidden
                         + hidden * action_size)
    bytes_accessed = (
        b_pad * state_size * 4                                          # state
        + (state_size * hidden + hidden * hidden + hidden * action_size) * 4
        + (2 * hidden + action_size) * 4                                # biases
        + b_pad * action_size * 4)                                      # output
    cost = pl.CostEstimate(flops=int(flops),
                           transcendentals=int(b_pad * action_size),
                           bytes_accessed=int(bytes_accessed))

    resident = lambda shape: pl.BlockSpec(shape, lambda i: (0, 0))

    out = pl.pallas_call(
        actor_kernel,
        out_shape=jax.ShapeDtypeStruct((b_pad, action_size), jnp.float32),
        grid_spec=pltpu.PrefetchScalarGridSpec(
            num_scalar_prefetch=0,
            grid=grid,
            in_specs=[
                pl.BlockSpec((tb, state_size), lambda i: (i, 0)),  # state tile
                resident(params["w1"].shape), resident(params["b1"].shape),
                resident(params["w2"].shape), resident(params["b2"].shape),
                resident(params["w3"].shape), resident(params["b3"].shape),
            ],
            out_specs=pl.BlockSpec((tb, action_size), lambda i: (i, 0)),
        ),
        compiler_params=pltpu.CompilerParams(
            dimension_semantics=("parallel",),  # megacore split on v7x
        ),
        cost_estimate=cost,
    )(state_p, params["w1"], params["b1"], params["w2"], params["b2"],
      params["w3"], params["b3"])

    # Strip batch padding only (output is already lane-compact).
    return out[:B]


def init_actor_params(key, state_size, action_size, hidden=HIDDEN):
    """Deterministic init mirroring the PyTorch module's init scheme."""
    k1, k2, k3, kb1, kb2, kb3 = jax.random.split(key, 6)

    # kaiming_normal_ (fan_in, leaky_relu gain default a=0): std = sqrt(2/fan_in)
    w1 = jax.random.normal(k1, (state_size, hidden), jnp.float32) * jnp.sqrt(2.0 / state_size)
    w2 = jax.random.normal(k2, (hidden, hidden), jnp.float32) * jnp.sqrt(2.0 / hidden)

    # xavier_normal_ with tanh gain (5/3): std = gain * sqrt(2/(fan_in+fan_out))
    gain = 5.0 / 3.0
    w3 = jax.random.normal(k3, (hidden, action_size), jnp.float32) * (
        gain * jnp.sqrt(2.0 / (hidden + action_size)))

    # PyTorch Linear default bias init: U(-1/sqrt(fan_in), 1/sqrt(fan_in))
    b1 = jax.random.uniform(kb1, (1, hidden), jnp.float32,
                            -1.0 / jnp.sqrt(state_size), 1.0 / jnp.sqrt(state_size))
    b2 = jax.random.uniform(kb2, (1, hidden), jnp.float32,
                            -1.0 / jnp.sqrt(hidden), 1.0 / jnp.sqrt(hidden))
    b3 = jax.random.uniform(kb3, (1, action_size), jnp.float32,
                            -1.0 / jnp.sqrt(hidden), 1.0 / jnp.sqrt(hidden))

    return {"w1": w1, "b1": b1, "w2": w2, "b2": b2, "w3": w3, "b3": b3}


def actor_reference(state, p):
    """Pure-JAX f32 reference for correctness checking."""
    prec = lax.Precision.HIGHEST
    lrelu = lambda x: jnp.maximum(x, 0.01 * x)
    h1 = lrelu(jnp.dot(state, p["w1"], precision=prec) + p["b1"])
    h2 = lrelu(jnp.dot(h1, p["w2"], precision=prec) + p["b2"])
    return jnp.tanh(jnp.dot(h2, p["w3"], precision=prec) + p["b3"])


if __name__ == "__main__":
    key = jax.random.PRNGKey(0)
    k_state, k_params = jax.random.split(key)

    batch = 8
    state_size = 16
    action_size = 4

    state = jax.random.normal(k_state, (batch, state_size), jnp.float32)
    params = init_actor_params(k_params, state_size, action_size)

    out = actor_forward(state, params)
    out = jax.block_until_ready(out)

    ref = actor_reference(state, params)
    assert out.shape == (batch, action_size), out.shape
    # f32 everywhere + HIGHEST matmul precision -> tight agreement with ref.
    assert jnp.allclose(out, ref, atol=1e-3, rtol=1e-3), "mismatch vs reference"

    print("KERNEL_OK")
</pallas_src>

<mosaic_0001>
module attributes {stable_mosaic.version = 11 : i64} {
  func.func @actor_kernel(%arg0: i32, %arg1: memref<8x16xf32, #tpu.memory_space<vmem>>, %arg2: memref<16x256xf32, #tpu.memory_space<vmem>>, %arg3: memref<1x256xf32, #tpu.memory_space<vmem>>, %arg4: memref<256x256xf32, #tpu.memory_space<vmem>>, %arg5: memref<1x256xf32, #tpu.memory_space<vmem>>, %arg6: memref<256x4xf32, #tpu.memory_space<vmem>>, %arg7: memref<1x4xf32, #tpu.memory_space<vmem>>, %arg8: memref<8x4xf32, #tpu.memory_space<vmem>>) attributes {dimension_semantics = [#tpu.dimension_semantics<parallel>], iteration_bounds = array<i64: 1>, scalar_prefetch = 0 : i64, scratch_operands = 0 : i64, tpu.core_type = #tpu.core_type<tc>, window_params = [{transform_indices = @transform_0, window_bounds = array<i64: 8, 16>}, {pipeline_mode = #tpu.pipeline_mode<synchronous>, transform_indices = @transform_1, window_bounds = array<i64: 16, 256>}, {pipeline_mode = #tpu.pipeline_mode<synchronous>, transform_indices = @transform_2, window_bounds = array<i64: 1, 256>}, {pipeline_mode = #tpu.pipeline_mode<synchronous>, transform_indices = @transform_3, window_bounds = array<i64: 256, 256>}, {pipeline_mode = #tpu.pipeline_mode<synchronous>, transform_indices = @transform_4, window_bounds = array<i64: 1, 256>}, {pipeline_mode = #tpu.pipeline_mode<synchronous>, transform_indices = @transform_5, window_bounds = array<i64: 256, 4>}, {pipeline_mode = #tpu.pipeline_mode<synchronous>, transform_indices = @transform_6, window_bounds = array<i64: 1, 4>}, {transform_indices = @transform_7, window_bounds = array<i64: 8, 4>}]} {
    %c0 = arith.constant 0 : index
    %c0_0 = arith.constant 0 : index
    %0 = vector.load %arg1[%c0, %c0_0] : memref<8x16xf32, #tpu.memory_space<vmem>>, vector<8x16xf32>
    %c0_1 = arith.constant 0 : index
    %c0_2 = arith.constant 0 : index
    %1 = vector.load %arg2[%c0_1, %c0_2] : memref<16x256xf32, #tpu.memory_space<vmem>>, vector<16x256xf32>
    %cst = arith.constant dense<0.000000e+00> : vector<8x256xf32>
    %2 = tpu.matmul %0, %1, %cst {dimension_numbers = #tpu.dot_dimension_numbers<[1], [0], [0], [1], [0, 0, 1, 1], [], []>, precision = #tpu.contract_precision<fp32>} : vector<8x16xf32>, vector<16x256xf32>, vector<8x256xf32> -> vector<8x256xf32>
    %c0_3 = arith.constant 0 : index
    %c0_4 = arith.constant 0 : index
    %3 = vector.load %arg3[%c0_3, %c0_4] : memref<1x256xf32, #tpu.memory_space<vmem>>, vector<1x256xf32>
    %4 = vector.broadcast %3 : vector<1x256xf32> to vector<8x256xf32>
    %5 = arith.addf %2, %4 : vector<8x256xf32>
    %cst_5 = arith.constant 0.00999999977 : f32
    %6 = vector.broadcast %cst_5 : f32 to vector<8x256xf32>
    %7 = arith.mulf %6, %5 : vector<8x256xf32>
    %8 = arith.maximumf %5, %7 : vector<8x256xf32>
    %c0_6 = arith.constant 0 : index
    %c0_7 = arith.constant 0 : index
    %9 = vector.load %arg4[%c0_6, %c0_7] : memref<256x256xf32, #tpu.memory_space<vmem>>, vector<256x256xf32>
    %cst_8 = arith.constant dense<0.000000e+00> : vector<8x256xf32>
    %10 = tpu.matmul %8, %9, %cst_8 {dimension_numbers = #tpu.dot_dimension_numbers<[1], [0], [0], [1], [0, 0, 1, 1], [], []>, precision = #tpu.contract_precision<fp32>} : vector<8x256xf32>, vector<256x256xf32>, vector<8x256xf32> -> vector<8x256xf32>
    %c0_9 = arith.constant 0 : index
    %c0_10 = arith.constant 0 : index
    %11 = vector.load %arg5[%c0_9, %c0_10] : memref<1x256xf32, #tpu.memory_space<vmem>>, vector<1x256xf32>
    %12 = vector.broadcast %11 : vector<1x256xf32> to vector<8x256xf32>
    %13 = arith.addf %10, %12 : vector<8x256xf32>
    %cst_11 = arith.constant 0.00999999977 : f32
    %14 = vector.broadcast %cst_11 : f32 to vector<8x256xf32>
    %15 = arith.mulf %14, %13 : vector<8x256xf32>
    %16 = arith.maximumf %13, %15 : vector<8x256xf32>
    %c0_12 = arith.constant 0 : index
    %c0_13 = arith.constant 0 : index
    %17 = vector.load %arg6[%c0_12, %c0_13] : memref<256x4xf32, #tpu.memory_space<vmem>>, vector<256x4xf32>
    %cst_14 = arith.constant dense<0.000000e+00> : vector<8x4xf32>
    %18 = tpu.matmul %16, %17, %cst_14 {dimension_numbers = #tpu.dot_dimension_numbers<[1], [0], [0], [1], [0, 0, 1, 1], [], []>, precision = #tpu.contract_precision<fp32>} : vector<8x256xf32>, vector<256x4xf32>, vector<8x4xf32> -> vector<8x4xf32>
    %c0_15 = arith.constant 0 : index
    %c0_16 = arith.constant 0 : index
    %19 = vector.load %arg7[%c0_15, %c0_16] : memref<1x4xf32, #tpu.memory_space<vmem>>, vector<1x4xf32>
    %20 = vector.broadcast %19 : vector<1x4xf32> to vector<8x4xf32>
    %21 = arith.addf %18, %20 : vector<8x4xf32>
    %22 = math.tanh %21 : vector<8x4xf32>
    %c0_17 = arith.constant 0 : index
    %c0_18 = arith.constant 0 : index
    %23 = vector.load %arg8[%c0_17, %c0_18] : memref<8x4xf32, #tpu.memory_space<vmem>>, vector<8x4xf32>
    tpu.vector_store %arg8[%c0_17, %c0_18], %22 {strides = array<i32>} : memref<8x4xf32, #tpu.memory_space<vmem>>, vector<8x4xf32>,
    return
  }
  func.func @transform_0(%arg0: i32) -> (i32, i32) {
    %c0_i32 = arith.constant 0 : i32
    %c0_i32_0 = arith.constant 0 : i32
    return %arg0, %c0_i32 : i32, i32
  }
  func.func @transform_1(%arg0: i32) -> (i32, i32) {
    %c0_i32 = arith.constant 0 : i32
    %c0_i32_0 = arith.constant 0 : i32
    %c0_i32_1 = arith.constant 0 : i32
    return %c0_i32, %c0_i32_0 : i32, i32
  }
  func.func @transform_2(%arg0: i32) -> (i32, i32) {
    %c0_i32 = arith.constant 0 : i32
    %c0_i32_0 = arith.constant 0 : i32
    %c0_i32_1 = arith.constant 0 : i32
    return %c0_i32, %c0_i32_0 : i32, i32
  }
  func.func @transform_3(%arg0: i32) -> (i32, i32) {
    %c0_i32 = arith.constant 0 : i32
    %c0_i32_0 = arith.constant 0 : i32
    %c0_i32_1 = arith.constant 0 : i32
    return %c0_i32, %c0_i32_0 : i32, i32
  }
  func.func @transform_4(%arg0: i32) -> (i32, i32) {
    %c0_i32 = arith.constant 0 : i32
    %c0_i32_0 = arith.constant 0 : i32
    %c0_i32_1 = arith.constant 0 : i32
    return %c0_i32, %c0_i32_0 : i32, i32
  }
  func.func @transform_5(%arg0: i32) -> (i32, i32) {
    %c0_i32 = arith.constant 0 : i32
    %c0_i32_0 = arith.constant 0 : i32
    %c0_i32_1 = arith.constant 0 : i32
    return %c0_i32, %c0_i32_0 : i32, i32
  }
  func.func @transform_6(%arg0: i32) -> (i32, i32) {
    %c0_i32 = arith.constant 0 : i32
    %c0_i32_0 = arith.constant 0 : i32
    %c0_i32_1 = arith.constant 0 : i32
    return %c0_i32, %c0_i32_0 : i32, i32
  }
  func.func @transform_7(%arg0: i32) -> (i32, i32) {
    %c0_i32 = arith.constant 0 : i32
    %c0_i32_0 = arith.constant 0 : i32
    return %arg0, %c0_i32 : i32, i32
  }
}

</mosaic_0001>

<llo_original>
// kernel: tpu_custom_call.1
$region0: #{tpu_custom_call.1}
  #allocation0 [shape = 'u32[]', space=smem, size = 0x4, offset = 0x4, fixed_abs, tag = 'smem constant byte address 0x4 - core index']
  #allocation1 [shape = 'u32[144,128]{1,0:T(1,128)}', space=vmem, size = 0x12000, scoped, tag = 'internal scratch']
  %s0 = inlined_call_operand.vmem [shape: f32[8,16], index: 0, kind: input, shape index: {}]
  %s1 = inlined_call_operand.vmem [shape: f32[16,256], index: 1, kind: input, shape index: {}]
  %s2 = inlined_call_operand.vmem [shape: f32[1,256], index: 2, kind: input, shape index: {}]
  %s3 = inlined_call_operand.hbm [shape: f32[256,256], index: 3, kind: input, shape index: {}]
  %s4 = inlined_call_operand.vmem [shape: f32[1,256], index: 4, kind: input, shape index: {}]
  %s5 = inlined_call_operand.vmem [shape: f32[256,4], index: 5, kind: input, shape index: {}]
  %s6 = inlined_call_operand.vmem [shape: f32[1,4], index: 6, kind: input, shape index: {}]
  %s7 = inlined_call_operand.vmem [shape: f32[8,4], index: 7, kind: output, shape index: {}]
  %s8 = sld [smem:[#allocation0]]
  $region42: #{tpu_custom_call.1} parent=0
    _
  %s10 = ssub.s32 1, %s8
  %s11 = scalar_select 0, %s10, %s8
  $region1: #{tpu_custom_call.1} parent=0
    #allocation2 [shape = 'u8[262144]{0}', space=vmem, size = 0x40000, scoped, tag = 'input window, operand 3, single buffered']
    #allocation3 [shape = 's32[1]{0}', space=sflag, size = 0x4, scoped, tag = 'scoped memory for tpu_custom_call.1']
    %12 = vsyncpa [#allocation3], 0
    // Predicated region
    $region2: #{tpu_custom_call.1} parent=1 // pred_check
      _
    $region3: #{tpu_custom_call.1} parent=1 // pred_check_branch
      %14 = sbr.rel (0) target = $region5
    $region4: #{tpu_custom_call.1} parent=1 // pred_region
      _
    $region5: #{tpu_custom_call.1} parent=1 // pred_fallthru
      _
    // Predicated region
    $region6: #{tpu_custom_call.1} parent=1 // pred_check
      _
    $region7: #{tpu_custom_call.1} parent=1 // pred_check_branch
      %16 = sbr.rel (0) target = $region9
    $region8: #{tpu_custom_call.1} parent=1 // pred_region
      _
    $region9: #{tpu_custom_call.1} parent=1 // pred_fallthru
      _
    // Predicated region
    $region10: #{tpu_custom_call.1} parent=1 // pred_check
      _
    $region11: #{tpu_custom_call.1} parent=1 // pred_check_branch
      %18 = sbr.rel (0) target = $region13
    $region12: #{tpu_custom_call.1} parent=1 // pred_region
      _
    $region13: #{tpu_custom_call.1} parent=1 // pred_fallthru
      _
    // Predicated region
    $region14: #{tpu_custom_call.1} parent=1 // pred_check
      _
    $region15: #{tpu_custom_call.1} parent=1 // pred_check_branch
      %20 = sbr.rel (0) target = $region17
    $region16: #{tpu_custom_call.1} parent=1 // pred_region
      %s22 = ssub.s32 8192, 8192
      %23 = vsyncadd [#allocation3], %s22
      %s24 = sshll.u32 [#allocation2], 4
      %s25 = int_to_ptr.vmem [resolvable:$true] %s24
      %30 = dma.hbm_to_vmem [thread:$0]  %s3, 8192, %s25, [#allocation3], 256, 256, 16
    $region17: #{tpu_custom_call.1} parent=1 // pred_fallthru
      _
    // Predicated region
    $region18: #{tpu_custom_call.1} parent=1 // pred_check
      _
    $region19: #{tpu_custom_call.1} parent=1 // pred_check_branch
      %32 = sbr.rel (0) target = $region21
    $region20: #{tpu_custom_call.1} parent=1 // pred_region
      _
    $region21: #{tpu_custom_call.1} parent=1 // pred_fallthru
      _
    // Predicated region
    $region22: #{tpu_custom_call.1} parent=1 // pred_check
      _
    $region23: #{tpu_custom_call.1} parent=1 // pred_check_branch
      %34 = sbr.rel (0) target = $region25
    $region24: #{tpu_custom_call.1} parent=1 // pred_region
      _
    $region25: #{tpu_custom_call.1} parent=1 // pred_fallthru
      _
    // Predicated region
    $region26: #{tpu_custom_call.1} parent=1 // pred_check
      _
    $region27: #{tpu_custom_call.1} parent=1 // pred_check_branch
      %36 = sbr.rel (0) target = $region29
    $region28: #{tpu_custom_call.1} parent=1 // pred_region
      _
    $region29: #{tpu_custom_call.1} parent=1 // pred_fallthru
      _
    // Predicated region
    $region30: #{tpu_custom_call.1} parent=1 // pred_check
      _
    $region31: #{tpu_custom_call.1} parent=1 // pred_check_branch
      %38 = sbr.rel (0) target = $region33
    $region32: #{tpu_custom_call.1} parent=1 // pred_region
      %39 = dma.done [#allocation3], 8192
    $region33: #{tpu_custom_call.1} parent=1 // pred_fallthru
      _
    %v40 = vld [vmem:[%s0] sm:$0xff]
    %v41 = vld [vmem:[%s1] sm:$0xff]
    %v42 = vld [vmem:[%s1 + $0x8] sm:$0xff]
    %v43 = vld [vmem:[%s1 + $0x10] sm:$0xff]
    %v44 = vld [vmem:[%s1 + $0x18] sm:$0xff]
    %v45 = vld [vmem:[%s2] sm:$0x3]
    %v47 = vlaneseq
    %v48 = vshrl.u32 %v47, 7
    %v49 = vsub.s32 0, %v48
    %v50 = vrot.slane %v45, %v49
    %v51 = vlaneseq
    %v52 = vshrl.u32 %v51, 7
    %v53 = vsub.s32 1, %v52
    %v54 = vrot.slane %v45, %v53
    %vm57 = vcmask 130048
    %v59 = vsel %vm57, %v40, 0
    %v61 = vand.u32 %v42, 4294901760
    %62 = vmatprep.subr.mxu0 %v61
    %v63 = vand.u32 %v41, 4294901760
    %64 = vmatpush1.msra.mxu0 %v63
    %v65 = vand.u32 %v44, 4294901760
    %66 = vmatprep.subr.mxu0 %v65
    %v67 = vand.u32 %v43, 4294901760
    %68 = vmatpush1.msra.mxu0 %v67
    %69 = vmatprep.subr.mxu0 0.0
    %70 = vmatpush1.msra.mxu0 0.0
    %71 = vmatprep.subr.mxu0 0.0
    %72 = vmatpush1.msra.mxu0 0.0
    %73 = vmatprep.subr.mxu0 0.0
    %74 = vmatpush1.msra.mxu0 0.0
    %75 = vmatprep.subr.mxu0 0.0
    %76 = vmatpush1.msra.mxu0 0.0
    %77 = vmatprep.subr.mxu0 0.0
    %78 = vmatpush1.msra.mxu0 0.0
    %79 = vmatprep.subr.mxu0 0.0
    %80 = vmatpush1.msra.mxu0 0.0
    %81 = vmatprep.subr.mxu0 0.0
    %82 = vmatpush1.msra.mxu0 0.0
    %83 = vmatprep.subr.mxu0 0.0
    %84 = vmatpush1.msra.mxu0 0.0
    %85 = vmatprep.subr.mxu0 0.0
    %86 = vmatpush1.msra.mxu0 0.0
    %87 = vmatprep.subr.mxu0 0.0
    %88 = vmatpush1.msra.mxu0 0.0
    %89 = vmatprep.subr.mxu0 0.0
    %90 = vmatpush1.msra.mxu0 0.0
    %91 = vmatprep.subr.mxu0 0.0
    %92 = vmatpush1.msra.mxu0 0.0
    %93 = vmatprep.subr.mxu0 0.0
    %94 = vmatpush1.msra.mxu0 0.0
    %95 = vmatprep.subr.mxu0 0.0
    %96 = vmatpush1.msra.mxu0 0.0
    %97 = vmatprep.subr.mxu0 0.0
    %98 = vmatpush1.msra.mxu0 0.0
    %99 = vmatprep.subr.mxu0 0.0
    %100 = vmatpush1.msra.mxu0 0.0
    %101 = vmatprep.subr.mxu0 0.0
    %102 = vmatpush1.msra.mxu0 0.0
    %103 = vmatprep.subr.mxu0 0.0
    %104 = vmatpush1.msra.mxu0 0.0
    %105 = vmatprep.subr.mxu0 0.0
    %106 = vmatpush1.msra.mxu0 0.0
    %107 = vmatprep.subr.mxu0 0.0
    %108 = vmatpush1.msra.mxu0 0.0
    %109 = vmatprep.subr.mxu0 0.0
    %110 = vmatpush1.msra.mxu0 0.0
    %111 = vmatprep.subr.mxu0 0.0
    %112 = vmatpush1.msra.mxu0 0.0
    %113 = vmatprep.subr.mxu0 0.0
    %114 = vmatpush1.msra.mxu0 0.0
    %115 = vmatprep.subr.mxu0 0.0
    %116 = vmatpush1.msra.mxu0 0.0
    %117 = vmatprep.subr.mxu0 0.0
    %118 = vmatpush1.msra.mxu0 0.0
    %119 = vmatprep.subr.mxu0 0.0
    %120 = vmatpush1.msra.mxu0 0.0
    %121 = vmatprep.subr.mxu0 0.0
    %122 = vmatpush1.msra.mxu0 0.0
    %123 = vmatprep.subr.mxu0 0.0
    %124 = vmatpush1.msra.mxu0 0.0
    %125 = vmatprep.subr.mxu0 0.0
    %126 = vmatpush1.msra.mxu0 0.0
    %127 = vmatprep.subr.mxu0 0.0
    %128 = vmatpush1.msra.mxu0 0.0
    %129 = vmatprep.mubr.f32.mxu0 0.0
    %v130 = vand.u32 %v59, 4294901760
    %v131 = vsub.f32 %v59, %v130
    %v132 = vand.u32 %v131, 4294901760
    %v133 = vsub.f32 %v131, %v132
    %v134 = vand.u32 %v133, 4294901760
    %135 = vmatmul.mubr.f32.gmra.mrb[0].mxu0 %v134
    %v136 = vpop.f32.mrb[0].mxu0
    %v137 = vadd.f32 %v50, %v136
    %v138 = vpop.f32.mrb[0].mxu0
    %v139 = vadd.f32 %v54, %v138
    %140 = vdwg.mxu0
    %v141 = vand.u32 %v42, 4294901760
    %v142 = vsub.f32 %v42, %v141
    %v143 = vand.u32 %v142, 4294901760
    %v144 = vsub.f32 %v142, %v143
    %v145 = vand.u32 %v144, 4294901760
    %146 = vmatprep.subr.mxu0 %v145
    %v147 = vand.u32 %v41, 4294901760
    %v148 = vsub.f32 %v41, %v147
    %v149 = vand.u32 %v148, 4294901760
    %v150 = vsub.f32 %v148, %v149
    %v151 = vand.u32 %v150, 4294901760
    %152 = vmatpush1.msra.mxu0 %v151
    %v153 = vand.u32 %v44, 4294901760
    %v154 = vsub.f32 %v44, %v153
    %v155 = vand.u32 %v154, 4294901760
    %v156 = vsub.f32 %v154, %v155
    %v157 = vand.u32 %v156, 4294901760
    %158 = vmatprep.subr.mxu0 %v157
    %v159 = vand.u32 %v43, 4294901760
    %v160 = vsub.f32 %v43, %v159
    %v161 = vand.u32 %v160, 4294901760
    %v162 = vsub.f32 %v160, %v161
    %v163 = vand.u32 %v162, 4294901760
    %164 = vmatpush1.msra.mxu0 %v163
    %165 = vmatprep.subr.mxu0 0.0
    %166 = vmatpush1.msra.mxu0 0.0
    %167 = vmatprep.subr.mxu0 0.0
    %168 = vmatpush1.msra.mxu0 0.0
    %169 = vmatprep.subr.mxu0 0.0
    %170 = vmatpush1.msra.mxu0 0.0
    %171 = vmatprep.subr.mxu0 0.0
    %172 = vmatpush1.msra.mxu0 0.0
    %173 = vmatprep.subr.mxu0 0.0
    %174 = vmatpush1.msra.mxu0 0.0
    %175 = vmatprep.subr.mxu0 0.0
    %176 = vmatpush1.msra.mxu0 0.0
    %177 = vmatprep.subr.mxu0 0.0
    %178 = vmatpush1.msra.mxu0 0.0
    %179 = vmatprep.subr.mxu0 0.0
    %180 = vmatpush1.msra.mxu0 0.0
    %181 = vmatprep.subr.mxu0 0.0
    %182 = vmatpush1.msra.mxu0 0.0
    %183 = vmatprep.subr.mxu0 0.0
    %184 = vmatpush1.msra.mxu0 0.0
    %185 = vmatprep.subr.mxu0 0.0
    %186 = vmatpush1.msra.mxu0 0.0
    %187 = vmatprep.subr.mxu0 0.0
    %188 = vmatpush1.msra.mxu0 0.0
    %189 = vmatprep.subr.mxu0 0.0
    %190 = vmatpush1.msra.mxu0 0.0
    %191 = vmatprep.subr.mxu0 0.0
    %192 = vmatpush1.msra.mxu0 0.0
    %193 = vmatprep.subr.mxu0 0.0
    %194 = vmatpush1.msra.mxu0 0.0
    %195 = vmatprep.subr.mxu0 0.0
    %196 = vmatpush1.msra.mxu0 0.0
    %197 = vmatprep.subr.mxu0 0.0
    %198 = vmatpush1.msra.mxu0 0.0
    %199 = vmatprep.subr.mxu0 0.0
    %200 = vmatpush1.msra.mxu0 0.0
    %201 = vmatprep.subr.mxu0 0.0
    %202 = vmatpush1.msra.mxu0 0.0
    %203 = vmatprep.subr.mxu0 0.0
    %204 = vmatpush1.msra.mxu0 0.0
    %205 = vmatprep.subr.mxu0 0.0
    %206 = vmatpush1.msra.mxu0 0.0
    %207 = vmatprep.subr.mxu0 0.0
    %208 = vmatpush1.msra.mxu0 0.0
    %209 = vmatprep.subr.mxu0 0.0
    %210 = vmatpush1.msra.mxu0 0.0
    %211 = vmatprep.subr.mxu0 0.0
    %212 = vmatpush1.msra.mxu0 0.0
    %213 = vmatprep.subr.mxu0 0.0
    %214 = vmatpush1.msra.mxu0 0.0
    %215 = vmatprep.subr.mxu0 0.0
    %216 = vmatpush1.msra.mxu0 0.0
    %217 = vmatprep.subr.mxu0 0.0
    %218 = vmatpush1.msra.mxu0 0.0
    %219 = vmatprep.subr.mxu0 0.0
    %220 = vmatpush1.msra.mxu0 0.0
    %221 = vmatprep.subr.mxu0 0.0
    %222 = vmatpush1.msra.mxu0 0.0
    %223 = vmatprep.subr.mxu0 0.0
    %224 = vmatpush1.msra.mxu0 0.0
    %225 = vmatprep.mubr.f32.mxu0 0.0
    %v226 = vand.u32 %v59, 4294901760
    %227 = vmatmul.mubr.f32.gmra.mrb[0].mxu0 %v226
    %v228 = vpop.f32.mrb[0].mxu0
    %v229 = vadd.f32 %v137, %v228
    %v230 = vpop.f32.mrb[0].mxu0
    %v231 = vadd.f32 %v139, %v230
    %232 = vdwg.mxu0
    %v233 = vand.u32 %v42, 4294901760
    %v234 = vsub.f32 %v42, %v233
    %235 = vmatprep.subr.mxu0 %v234
    %v236 = vand.u32 %v41, 4294901760
    %v237 = vsub.f32 %v41, %v236
    %238 = vmatpush1.msra.mxu0 %v237
    %v239 = vand.u32 %v44, 4294901760
    %v240 = vsub.f32 %v44, %v239
    %241 = vmatprep.subr.mxu0 %v240
    %v242 = vand.u32 %v43, 4294901760
    %v243 = vsub.f32 %v43, %v242
    %244 = vmatpush1.msra.mxu0 %v243
    %245 = vmatprep.subr.mxu0 0.0
    %246 = vmatpush1.msra.mxu0 0.0
    %247 = vmatprep.subr.mxu0 0.0
    %248 = vmatpush1.msra.mxu0 0.0
    %249 = vmatprep.subr.mxu0 0.0
    %250 = vmatpush1.msra.mxu0 0.0
    %251 = vmatprep.subr.mxu0 0.0
    %252 = vmatpush1.msra.mxu0 0.0
    %253 = vmatprep.subr.mxu0 0.0
    %254 = vmatpush1.msra.mxu0 0.0
    %255 = vmatprep.subr.mxu0 0.0
    %256 = vmatpush1.msra.mxu0 0.0
    %257 = vmatprep.subr.mxu0 0.0
    %258 = vmatpush1.msra.mxu0 0.0
    %259 = vmatprep.subr.mxu0 0.0
    %260 = vmatpush1.msra.mxu0 0.0
    %261 = vmatprep.subr.mxu0 0.0
    %262 = vmatpush1.msra.mxu0 0.0
    %263 = vmatprep.subr.mxu0 0.0
    %264 = vmatpush1.msra.mxu0 0.0
    %265 = vmatprep.subr.mxu0 0.0
    %266 = vmatpush1.msra.mxu0 0.0
    %267 = vmatprep.subr.mxu0 0.0
    %268 = vmatpush1.msra.mxu0 0.0
    %269 = vmatprep.subr.mxu0 0.0
    %270 = vmatpush1.msra.mxu0 0.0
    %271 = vmatprep.subr.mxu0 0.0
    %272 = vmatpush1.msra.mxu0 0.0
    %273 = vmatprep.subr.mxu0 0.0
    %274 = vmatpush1.msra.mxu0 0.0
    %275 = vmatprep.subr.mxu0 0.0
    %276 = vmatpush1.msra.mxu0 0.0
    %277 = vmatprep.subr.mxu0 0.0
    %278 = vmatpush1.msra.mxu0 0.0
    %279 = vmatprep.subr.mxu0 0.0
    %280 = vmatpush1.msra.mxu0 0.0
    %281 = vmatprep.subr.mxu0 0.0
    %282 = vmatpush1.msra.mxu0 0.0
    %283 = vmatprep.subr.mxu0 0.0
    %284 = vmatpush1.msra.mxu0 0.0
    %285 = vmatprep.subr.mxu0 0.0
    %286 = vmatpush1.msra.mxu0 0.0
    %287 = vmatprep.subr.mxu0 0.0
    %288 = vmatpush1.msra.mxu0 0.0
    %289 = vmatprep.subr.mxu0 0.0
    %290 = vmatpush1.msra.mxu0 0.0
    %291 = vmatprep.subr.mxu0 0.0
    %292 = vmatpush1.msra.mxu0 0.0
    %293 = vmatprep.subr.mxu0 0.0
    %294 = vmatpush1.msra.mxu0 0.0
    %295 = vmatprep.subr.mxu0 0.0
    %296 = vmatpush1.msra.mxu0 0.0
    %297 = vmatprep.subr.mxu0 0.0
    %298 = vmatpush1.msra.mxu0 0.0
    %299 = vmatprep.subr.mxu0 0.0
    %300 = vmatpush1.msra.mxu0 0.0
    %301 = vmatprep.subr.mxu0 0.0
    %302 = vmatpush1.msra.mxu0 0.0
    %303 = vmatprep.subr.mxu0 0.0
    %304 = vmatpush1.msra.mxu0 0.0
    %305 = vmatprep.mubr.f32.mxu0 0.0
    %v306 = vand.u32 %v59, 4294901760
    %v307 = vsub.f32 %v59, %v306
    %308 = vmatmul.mubr.f32.gmra.mrb[0].mxu0 %v307
    %v309 = vpop.f32.mrb[0].mxu0
    %v310 = vadd.f32 %v229, %v309
    %v311 = vpop.f32.mrb[0].mxu0
    %v312 = vadd.f32 %v231, %v311
    %313 = vdwg.mxu0
    %v314 = vand.u32 %v42, 4294901760
    %315 = vmatprep.subr.mxu0 %v314
    %v316 = vand.u32 %v41, 4294901760
    %317 = vmatpush1.msra.mxu0 %v316
    %v318 = vand.u32 %v44, 4294901760
    %319 = vmatprep.subr.mxu0 %v318
    %v320 = vand.u32 %v43, 4294901760
    %321 = vmatpush1.msra.mxu0 %v320
    %322 = vmatprep.subr.mxu0 0.0
    %323 = vmatpush1.msra.mxu0 0.0
    %324 = vmatprep.subr.mxu0 0.0
    %325 = vmatpush1.msra.mxu0 0.0
    %326 = vmatprep.subr.mxu0 0.0
    %327 = vmatpush1.msra.mxu0 0.0
    %328 = vmatprep.subr.mxu0 0.0
    %329 = vmatpush1.msra.mxu0 0.0
    %330 = vmatprep.subr.mxu0 0.0
    %331 = vmatpush1.msra.mxu0 0.0
    %332 = vmatprep.subr.mxu0 0.0
    %333 = vmatpush1.msra.mxu0 0.0
    %334 = vmatprep.subr.mxu0 0.0
    %335 = vmatpush1.msra.mxu0 0.0
    %336 = vmatprep.subr.mxu0 0.0
    %337 = vmatpush1.msra.mxu0 0.0
    %338 = vmatprep.subr.mxu0 0.0
    %339 = vmatpush1.msra.mxu0 0.0
    %340 = vmatprep.subr.mxu0 0.0
    %341 = vmatpush1.msra.mxu0 0.0
    %342 = vmatprep.subr.mxu0 0.0
    %343 = vmatpush1.msra.mxu0 0.0
    %344 = vmatprep.subr.mxu0 0.0
    %345 = vmatpush1.msra.mxu0 0.0
    %346 = vmatprep.subr.mxu0 0.0
    %347 = vmatpush1.msra.mxu0 0.0
    %348 = vmatprep.subr.mxu0 0.0
    %349 = vmatpush1.msra.mxu0 0.0
    %350 = vmatprep.subr.mxu0 0.0
    %351 = vmatpush1.msra.mxu0 0.0
    %352 = vmatprep.subr.mxu0 0.0
    %353 = vmatpush1.msra.mxu0 0.0
    %354 = vmatprep.subr.mxu0 0.0
    %355 = vmatpush1.msra.mxu0 0.0
    %356 = vmatprep.subr.mxu0 0.0
    %357 = vmatpush1.msra.mxu0 0.0
    %358 = vmatprep.subr.mxu0 0.0
    %359 = vmatpush1.msra.mxu0 0.0
    %360 = vmatprep.subr.mxu0 0.0
    %361 = vmatpush1.msra.mxu0 0.0
    %362 = vmatprep.subr.mxu0 0.0
    %363 = vmatpush1.msra.mxu0 0.0
    %364 = vmatprep.subr.mxu0 0.0
    %365 = vmatpush1.msra.mxu0 0.0
    %366 = vmatprep.subr.mxu0 0.0
    %367 = vmatpush1.msra.mxu0 0.0
    %368 = vmatprep.subr.mxu0 0.0
    %369 = vmatpush1.msra.mxu0 0.0
    %370 = vmatprep.subr.mxu0 0.0
    %371 = vmatpush1.msra.mxu0 0.0
    %372 = vmatprep.subr.mxu0 0.0
    %373 = vmatpush1.msra.mxu0 0.0
    %374 = vmatprep.subr.mxu0 0.0
    %375 = vmatpush1.msra.mxu0 0.0
    %376 = vmatprep.subr.mxu0 0.0
    %377 = vmatpush1.msra.mxu0 0.0
    %378 = vmatprep.subr.mxu0 0.0
    %379 = vmatpush1.msra.mxu0 0.0
    %380 = vmatprep.subr.mxu0 0.0
    %381 = vmatpush1.msra.mxu0 0.0
    %382 = vmatprep.mubr.f32.mxu0 0.0
    %v383 = vand.u32 %v59, 4294901760
    %v384 = vsub.f32 %v59, %v383
    %v385 = vand.u32 %v384, 4294901760
    %386 = vmatmul.mubr.f32.gmra.mrb[0].mxu0 %v385
    %v387 = vpop.f32.mrb[0].mxu0
    %v388 = vadd.f32 %v310, %v387
    %v389 = vpop.f32.mrb[0].mxu0
    %v390 = vadd.f32 %v312, %v389
    %391 = vdwg.mxu0
    %v392 = vand.u32 %v42, 4294901760
    %v393 = vsub.f32 %v42, %v392
    %v394 = vand.u32 %v393, 4294901760
    %395 = vmatprep.subr.mxu0 %v394
    %v396 = vand.u32 %v41, 4294901760
    %v397 = vsub.f32 %v41, %v396
    %v398 = vand.u32 %v397, 4294901760
    %399 = vmatpush1.msra.mxu0 %v398
    %v400 = vand.u32 %v44, 4294901760
    %v401 = vsub.f32 %v44, %v400
    %v402 = vand.u32 %v401, 4294901760
    %403 = vmatprep.subr.mxu0 %v402
    %v404 = vand.u32 %v43, 4294901760
    %v405 = vsub.f32 %v43, %v404
    %v406 = vand.u32 %v405, 4294901760
    %407 = vmatpush1.msra.mxu0 %v406
    %408 = vmatprep.subr.mxu0 0.0
    %409 = vmatpush1.msra.mxu0 0.0
    %410 = vmatprep.subr.mxu0 0.0
    %411 = vmatpush1.msra.mxu0 0.0
    %412 = vmatprep.subr.mxu0 0.0
    %413 = vmatpush1.msra.mxu0 0.0
    %414 = vmatprep.subr.mxu0 0.0
    %415 = vmatpush1.msra.mxu0 0.0
    %416 = vmatprep.subr.mxu0 0.0
    %417 = vmatpush1.msra.mxu0 0.0
    %418 = vmatprep.subr.mxu0 0.0
    %419 = vmatpush1.msra.mxu0 0.0
    %420 = vmatprep.subr.mxu0 0.0
    %421 = vmatpush1.msra.mxu0 0.0
    %422 = vmatprep.subr.mxu0 0.0
    %423 = vmatpush1.msra.mxu0 0.0
    %424 = vmatprep.subr.mxu0 0.0
    %425 = vmatpush1.msra.mxu0 0.0
    %426 = vmatprep.subr.mxu0 0.0
    %427 = vmatpush1.msra.mxu0 0.0
    %428 = vmatprep.subr.mxu0 0.0
    %429 = vmatpush1.msra.mxu0 0.0
    %430 = vmatprep.subr.mxu0 0.0
    %431 = vmatpush1.msra.mxu0 0.0
    %432 = vmatprep.subr.mxu0 0.0
    %433 = vmatpush1.msra.mxu0 0.0
    %434 = vmatprep.subr.mxu0 0.0
    %435 = vmatpush1.msra.mxu0 0.0
    %436 = vmatprep.subr.mxu0 0.0
    %437 = vmatpush1.msra.mxu0 0.0
    %438 = vmatprep.subr.mxu0 0.0
    %439 = vmatpush1.msra.mxu0 0.0
    %440 = vmatprep.subr.mxu0 0.0
    %441 = vmatpush1.msra.mxu0 0.0
    %442 = vmatprep.subr.mxu0 0.0
    %443 = vmatpush1.msra.mxu0 0.0
    %444 = vmatprep.subr.mxu0 0.0
    %445 = vmatpush1.msra.mxu0 0.0
    %446 = vmatprep.subr.mxu0 0.0
    %447 = vmatpush1.msra.mxu0 0.0
    %448 = vmatprep.subr.mxu0 0.0
    %449 = vmatpush1.msra.mxu0 0.0
    %450 = vmatprep.subr.mxu0 0.0
    %451 = vmatpush1.msra.mxu0 0.0
    %452 = vmatprep.subr.mxu0 0.0
    %453 = vmatpush1.msra.mxu0 0.0
    %454 = vmatprep.subr.mxu0 0.0
    %455 = vmatpush1.msra.mxu0 0.0
    %456 = vmatprep.subr.mxu0 0.0
    %457 = vmatpush1.msra.mxu0 0.0
    %458 = vmatprep.subr.mxu0 0.0
    %459 = vmatpush1.msra.mxu0 0.0
    %460 = vmatprep.subr.mxu0 0.0
    %461 = vmatpush1.msra.mxu0 0.0
    %462 = vmatprep.subr.mxu0 0.0
    %463 = vmatpush1.msra.mxu0 0.0
    %464 = vmatprep.subr.mxu0 0.0
    %465 = vmatpush1.msra.mxu0 0.0
    %466 = vmatprep.subr.mxu0 0.0
    %467 = vmatpush1.msra.mxu0 0.0
    %468 = vmatprep.mubr.f32.mxu0 0.0
    %v469 = vand.u32 %v59, 4294901760
    %470 = vmatmul.mubr.f32.gmra.mrb[0].mxu0 %v469
    %v471 = vpop.f32.mrb[0].mxu0
    %v472 = vadd.f32 %v388, %v471
    %v473 = vpop.f32.mrb[0].mxu0
    %v474 = vadd.f32 %v390, %v473
    %475 = vdwg.mxu0
    %v476 = vand.u32 %v42, 4294901760
    %477 = vmatprep.subr.mxu0 %v476
    %v478 = vand.u32 %v41, 4294901760
    %479 = vmatpush1.msra.mxu0 %v478
    %v480 = vand.u32 %v44, 4294901760
    %481 = vmatprep.subr.mxu0 %v480
    %v482 = vand.u32 %v43, 4294901760
    %483 = vmatpush1.msra.mxu0 %v482
    %484 = vmatprep.subr.mxu0 0.0
    %485 = vmatpush1.msra.mxu0 0.0
    %486 = vmatprep.subr.mxu0 0.0
    %487 = vmatpush1.msra.mxu0 0.0
    %488 = vmatprep.subr.mxu0 0.0
    %489 = vmatpush1.msra.mxu0 0.0
    %490 = vmatprep.subr.mxu0 0.0
    %491 = vmatpush1.msra.mxu0 0.0
    %492 = vmatprep.subr.mxu0 0.0
    %493 = vmatpush1.msra.mxu0 0.0
    %494 = vmatprep.subr.mxu0 0.0
    %495 = vmatpush1.msra.mxu0 0.0
    %496 = vmatprep.subr.mxu0 0.0
    %497 = vmatpush1.msra.mxu0 0.0
    %498 = vmatprep.subr.mxu0 0.0
    %499 = vmatpush1.msra.mxu0 0.0
    %500 = vmatprep.subr.mxu0 0.0
    %501 = vmatpush1.msra.mxu0 0.0
    %502 = vmatprep.subr.mxu0 0.0
    %503 = vmatpush1.msra.mxu0 0.0
    %504 = vmatprep.subr.mxu0 0.0
    %505 = vmatpush1.msra.mxu0 0.0
    %506 = vmatprep.subr.mxu0 0.0
    %507 = vmatpush1.msra.mxu0 0.0
    %508 = vmatprep.subr.mxu0 0.0
    %509 = vmatpush1.msra.mxu0 0.0
    %510 = vmatprep.subr.mxu0 0.0
    %511 = vmatpush1.msra.mxu0 0.0
    %512 = vmatprep.subr.mxu0 0.0
    %513 = vmatpush1.msra.mxu0 0.0
    %514 = vmatprep.subr.mxu0 0.0
    %515 = vmatpush1.msra.mxu0 0.0
    %516 = vmatprep.subr.mxu0 0.0
    %517 = vmatpush1.msra.mxu0 0.0
    %518 = vmatprep.subr.mxu0 0.0
    %519 = vmatpush1.msra.mxu0 0.0
    %520 = vmatprep.subr.mxu0 0.0
    %521 = vmatpush1.msra.mxu0 0.0
    %522 = vmatprep.subr.mxu0 0.0
    %523 = vmatpush1.msra.mxu0 0.0
    %524 = vmatprep.subr.mxu0 0.0
    %525 = vmatpush1.msra.mxu0 0.0
    %526 = vmatprep.subr.mxu0 0.0
    %527 = vmatpush1.msra.mxu0 0.0
    %528 = vmatprep.subr.mxu0 0.0
    %529 = vmatpush1.msra.mxu0 0.0
    %530 = vmatprep.subr.mxu0 0.0
    %531 = vmatpush1.msra.mxu0 0.0
    %532 = vmatprep.subr.mxu0 0.0
    %533 = vmatpush1.msra.mxu0 0.0
    %534 = vmatprep.subr.mxu0 0.0
    %535 = vmatpush1.msra.mxu0 0.0
    %536 = vmatprep.subr.mxu0 0.0
    %537 = vmatpush1.msra.mxu0 0.0
    %538 = vmatprep.subr.mxu0 0.0
    %539 = vmatpush1.msra.mxu0 0.0
    %540 = vmatprep.subr.mxu0 0.0
    %541 = vmatpush1.msra.mxu0 0.0
    %542 = vmatprep.subr.mxu0 0.0
    %543 = vmatpush1.msra.mxu0 0.0
    %544 = vmatprep.mubr.f32.mxu0 0.0
    %v545 = vand.u32 %v59, 4294901760
    %546 = vmatmul.mubr.f32.gmra.mrb[0].mxu0 %v545
    %v547 = vpop.f32.mrb[0].mxu0
    %v548 = vadd.f32 %v472, %v547
    %v549 = vpop.f32.mrb[0].mxu0
    %v550 = vadd.f32 %v474, %v549
    %551 = vdwg.mxu0
    %v552 = vmul.f32 %v548, 0.01
    %v553 = vmul.f32 %v550, 0.01
    %v554 = vmax.f32 %v548, %v552
    %v555 = vmax.f32 %v550, %v553
    %v556 = vld [vmem:[#allocation2] sm:$0xff]
    %v557 = vld [vmem:[#allocation2 + $0x8] sm:$0xff]
    %v558 = vld [vmem:[#allocation2 + $0x10] sm:$0xff]
    %v559 = vld [vmem:[#allocation2 + $0x18] sm:$0xff]
    %v560 = vld [vmem:[#allocation2 + $0x20] sm:$0xff]
    %v561 = vld [vmem:[#allocation2 + $0x28] sm:$0xff]
    %v562 = vld [vmem:[#allocation2 + $0x30] sm:$0xff]
    %v563 = vld [vmem:[#allocation2 + $0x38] sm:$0xff]
    %v564 = vld [vmem:[#allocation2 + $0x40] sm:$0xff]
    %v565 = vld [vmem:[#allocation2 + $0x48] sm:$0xff]
    %v566 = vld [vmem:[#allocation2 + $0x50] sm:$0xff]
    %v567 = vld [vmem:[#allocation2 + $0x58] sm:$0xff]
    %v568 = vld [vmem:[#allocation2 + $0x60] sm:$0xff]
    %v569 = vld [vmem:[#allocation2 + $0x68] sm:$0xff]
    %v570 = vld [vmem:[#allocation2 + $0x70] sm:$0xff]
    %v571 = vld [vmem:[#allocation2 + $0x78] sm:$0xff]
    %v572 = vld [vmem:[#allocation2 + $0x80] sm:$0xff]
    %v573 = vld [vmem:[#allocation2 + $0x88] sm:$0xff]
    %v574 = vld [vmem:[#allocation2 + $0x90] sm:$0xff]
    %v575 = vld [vmem:[#allocation2 + $0x98] sm:$0xff]
    %v576 = vld [vmem:[#allocation2 + $0xa0] sm:$0xff]
    %v577 = vld [vmem:[#allocation2 + $0xa8] sm:$0xff]
    %v578 = vld [vmem:[#allocation2 + $0xb0] sm:$0xff]
    %v579 = vld [vmem:[#allocation2 + $0xb8] sm:$0xff]
    %v580 = vld [vmem:[#allocation2 + $0xc0] sm:$0xff]
    %v581 = vld [vmem:[#allocation2 + $0xc8] sm:$0xff]
    %v582 = vld [vmem:[#allocation2 + $0xd0] sm:$0xff]
    %v583 = vld [vmem:[#allocation2 + $0xd8] sm:$0xff]
    %v584 = vld [vmem:[#allocation2 + $0xe0] sm:$0xff]
    %v585 = vld [vmem:[#allocation2 + $0xe8] sm:$0xff]
    %v586 = vld [vmem:[#allocation2 + $0xf0] sm:$0xff]
    %v587 = vld [vmem:[#allocation2 + $0xf8] sm:$0xff]
    %v588 = vld [vmem:[#allocation2 + $0x100] sm:$0xff]
    %v589 = vld [vmem:[#allocation2 + $0x108] sm:$0xff]
    %v590 = vld [vmem:[#allocation2 + $0x110] sm:$0xff]
    %v591 = vld [vmem:[#allocation2 + $0x118] sm:$0xff]
    %v592 = vld [vmem:[#allocation2 + $0x120] sm:$0xff]
    %v593 = vld [vmem:[#allocation2 + $0x128] sm:$0xff]
    %v594 = vld [vmem:[#allocation2 + $0x130] sm:$0xff]
    %v595 = vld [vmem:[#allocation2 + $0x138] sm:$0xff]
    %v596 = vld [vmem:[#allocation2 + $0x140] sm:$0xff]
    %v597 = vld [vmem:[#allocation2 + $0x148] sm:$0xff]
    %v598 = vld [vmem:[#allocation2 + $0x150] sm:$0xff]
    %v599 = vld [vmem:[#allocation2 + $0x158] sm:$0xff]
    %v600 = vld [vmem:[#allocation2 + $0x160] sm:$0xff]
    %v601 = vld [vmem:[#allocation2 + $0x168] sm:$0xff]
    %v602 = vld [vmem:[#allocation2 + $0x170] sm:$0xff]
    %v603 = vld [vmem:[#allocation2 + $0x178] sm:$0xff]
    %v604 = vld [vmem:[#allocation2 + $0x180] sm:$0xff]
    %v605 = vld [vmem:[#allocation2 + $0x188] sm:$0xff]
    %v606 = vld [vmem:[#allocation2 + $0x190] sm:$0xff]
    %v607 = vld [vmem:[#allocation2 + $0x198] sm:$0xff]
    %v608 = vld [vmem:[#allocation2 + $0x1a0] sm:$0xff]
    %v609 = vld [vmem:[#allocation2 + $0x1a8] sm:$0xff]
    %v610 = vld [vmem:[#allocation2 + $0x1b0] sm:$0xff]
    %v611 = vld [vmem:[#allocation2 + $0x1b8] sm:$0xff]
    %v612 = vld [vmem:[#allocation2 + $0x1c0] sm:$0xff]
    %v613 = vld [vmem:[#allocation2 + $0x1c8] sm:$0xff]
    %v614 = vld [vmem:[#allocation2 + $0x1d0] sm:$0xff]
    %v615 = vld [vmem:[#allocation2 + $0x1d8] sm:$0xff]
    %v616 = vld [vmem:[#allocation2 + $0x1e0] sm:$0xff]
    %v617 = vld [vmem:[#allocation2 + $0x1e8] sm:$0xff]
    %v618 = vld [vmem:[#allocation2 + $0x1f0] sm:$0xff]
    %v619 = vld [vmem:[#allocation2 + $0x1f8] sm:$0xff]
    %v620 = vld [vmem:[%s4] sm:$0x3]
    %v622 = vlaneseq
    %v623 = vshrl.u32 %v622, 7
    %v624 = vsub.s32 0, %v623
    %v625 = vrot.slane %v620, %v624
    %v626 = vlaneseq
    %v627 = vshrl.u32 %v626, 7
    %v628 = vsub.s32 1, %v627
    %v629 = vrot.slane %v620, %v628
    %v632 = vand.u32 %v557, 4294901760
    %633 = vmatprep.subr.mxu0 %v632
    %v634 = vand.u32 %v556, 4294901760
    %635 = vmatpush1.msra.mxu0 %v634
    %v636 = vand.u32 %v559, 4294901760
    %637 = vmatprep.subr.mxu0 %v636
    %v638 = vand.u32 %v558, 4294901760
    %639 = vmatpush1.msra.mxu0 %v638
    %v640 = vand.u32 %v561, 4294901760
    %641 = vmatprep.subr.mxu0 %v640
    %v642 = vand.u32 %v560, 4294901760
    %643 = vmatpush1.msra.mxu0 %v642
    %v644 = vand.u32 %v563, 4294901760
    %645 = vmatprep.subr.mxu0 %v644
    %v646 = vand.u32 %v562, 4294901760
    %647 = vmatpush1.msra.mxu0 %v646
    %v648 = vand.u32 %v565, 4294901760
    %649 = vmatprep.subr.mxu0 %v648
    %v650 = vand.u32 %v564, 4294901760
    %651 = vmatpush1.msra.mxu0 %v650
    %v652 = vand.u32 %v567, 4294901760
    %653 = vmatprep.subr.mxu0 %v652
    %v654 = vand.u32 %v566, 4294901760
    %655 = vmatpush1.msra.mxu0 %v654
    %v656 = vand.u32 %v569, 4294901760
    %657 = vmatprep.subr.mxu0 %v656
    %v658 = vand.u32 %v568, 4294901760
    %659 = vmatpush1.msra.mxu0 %v658
    %v660 = vand.u32 %v571, 4294901760
    %661 = vmatprep.subr.mxu0 %v660
    %v662 = vand.u32 %v570, 4294901760
    %663 = vmatpush1.msra.mxu0 %v662
    %v664 = vand.u32 %v573, 4294901760
    %665 = vmatprep.subr.mxu0 %v664
    %v666 = vand.u32 %v572, 4294901760
    %667 = vmatpush1.msra.mxu0 %v666
    %v668 = vand.u32 %v575, 4294901760
    %669 = vmatprep.subr.mxu0 %v668
    %v670 = vand.u32 %v574, 4294901760
    %671 = vmatpush1.msra.mxu0 %v670
    %v672 = vand.u32 %v577, 4294901760
    %673 = vmatprep.subr.mxu0 %v672
    %v674 = vand.u32 %v576, 4294901760
    %675 = vmatpush1.msra.mxu0 %v674
    %v676 = vand.u32 %v579, 4294901760
    %677 = vmatprep.subr.mxu0 %v676
    %v678 = vand.u32 %v578, 4294901760
    %679 = vmatpush1.msra.mxu0 %v678
    %v680 = vand.u32 %v581, 4294901760
    %681 = vmatprep.subr.mxu0 %v680
    %v682 = vand.u32 %v580, 4294901760
    %683 = vmatpush1.msra.mxu0 %v682
    %v684 = vand.u32 %v583, 4294901760
    %685 = vmatprep.subr.mxu0 %v684
    %v686 = vand.u32 %v582, 4294901760
    %687 = vmatpush1.msra.mxu0 %v686
    %v688 = vand.u32 %v585, 4294901760
    %689 = vmatprep.subr.mxu0 %v688
    %v690 = vand.u32 %v584, 4294901760
    %691 = vmatpush1.msra.mxu0 %v690
    %v692 = vand.u32 %v587, 4294901760
    %693 = vmatprep.subr.mxu0 %v692
    %v694 = vand.u32 %v586, 4294901760
    %695 = vmatpush1.msra.mxu0 %v694
    %v696 = vand.u32 %v589, 4294901760
    %697 = vmatprep.subr.mxu0 %v696
    %v698 = vand.u32 %v588, 4294901760
    %699 = vmatpush1.msra.mxu0 %v698
    %v700 = vand.u32 %v591, 4294901760
    %701 = vmatprep.subr.mxu0 %v700
    %v702 = vand.u32 %v590, 4294901760
    %703 = vmatpush1.msra.mxu0 %v702
    %v704 = vand.u32 %v593, 4294901760
    %705 = vmatprep.subr.mxu0 %v704
    %v706 = vand.u32 %v592, 4294901760
    %707 = vmatpush1.msra.mxu0 %v706
    %v708 = vand.u32 %v595, 4294901760
    %709 = vmatprep.subr.mxu0 %v708
    %v710 = vand.u32 %v594, 4294901760
    %711 = vmatpush1.msra.mxu0 %v710
    %v712 = vand.u32 %v597, 4294901760
    %713 = vmatprep.subr.mxu0 %v712
    %v714 = vand.u32 %v596, 4294901760
    %715 = vmatpush1.msra.mxu0 %v714
    %v716 = vand.u32 %v599, 4294901760
    %717 = vmatprep.subr.mxu0 %v716
    %v718 = vand.u32 %v598, 4294901760
    %719 = vmatpush1.msra.mxu0 %v718
    %v720 = vand.u32 %v601, 4294901760
    %721 = vmatprep.subr.mxu0 %v720
    %v722 = vand.u32 %v600, 4294901760
    %723 = vmatpush1.msra.mxu0 %v722
    %v724 = vand.u32 %v603, 4294901760
    %725 = vmatprep.subr.mxu0 %v724
    %v726 = vand.u32 %v602, 4294901760
    %727 = vmatpush1.msra.mxu0 %v726
    %v728 = vand.u32 %v605, 4294901760
    %729 = vmatprep.subr.mxu0 %v728
    %v730 = vand.u32 %v604, 4294901760
    %731 = vmatpush1.msra.mxu0 %v730
    %v732 = vand.u32 %v607, 4294901760
    %733 = vmatprep.subr.mxu0 %v732
    %v734 = vand.u32 %v606, 4294901760
    %735 = vmatpush1.msra.mxu0 %v734
    %v736 = vand.u32 %v609, 4294901760
    %737 = vmatprep.subr.mxu0 %v736
    %v738 = vand.u32 %v608, 4294901760
    %739 = vmatpush1.msra.mxu0 %v738
    %v740 = vand.u32 %v611, 4294901760
    %741 = vmatprep.subr.mxu0 %v740
    %v742 = vand.u32 %v610, 4294901760
    %743 = vmatpush1.msra.mxu0 %v742
    %v744 = vand.u32 %v613, 4294901760
    %745 = vmatprep.subr.mxu0 %v744
    %v746 = vand.u32 %v612, 4294901760
    %747 = vmatpush1.msra.mxu0 %v746
    %v748 = vand.u32 %v615, 4294901760
    %749 = vmatprep.subr.mxu0 %v748
    %v750 = vand.u32 %v614, 4294901760
    %751 = vmatpush1.msra.mxu0 %v750
    %v752 = vand.u32 %v617, 4294901760
    %753 = vmatprep.subr.mxu0 %v752
    %v754 = vand.u32 %v616, 4294901760
    %755 = vmatpush1.msra.mxu0 %v754
    %v756 = vand.u32 %v619, 4294901760
    %757 = vmatprep.subr.mxu0 %v756
    %v758 = vand.u32 %v618, 4294901760
    %759 = vmatpush1.msra.mxu0 %v758
    %v760 = vand.u32 %v555, 4294901760
    %v761 = vsub.f32 %v555, %v760
    %v762 = vand.u32 %v761, 4294901760
    %v763 = vsub.f32 %v761, %v762
    %v764 = vand.u32 %v763, 4294901760
    %765 = vmatprep.mubr.f32.mxu0 %v764
    %v766 = vand.u32 %v554, 4294901760
    %v767 = vsub.f32 %v554, %v766
    %v768 = vand.u32 %v767, 4294901760
    %v769 = vsub.f32 %v767, %v768
    %v770 = vand.u32 %v769, 4294901760
    %771 = vmatmul.mubr.f32.gmra.mrb[0].mxu0 %v770
    %v772 = vpop.f32.mrb[0].mxu0
    %v773 = vadd.f32 %v625, %v772
    %v774 = vpop.f32.mrb[0].mxu0
    %v775 = vadd.f32 %v629, %v774
    %776 = vdwg.mxu0
    %v777 = vand.u32 %v557, 4294901760
    %v778 = vsub.f32 %v557, %v777
    %v779 = vand.u32 %v778, 4294901760
    %v780 = vsub.f32 %v778, %v779
    %v781 = vand.u32 %v780, 4294901760
    %782 = vmatprep.subr.mxu0 %v781
    %v783 = vand.u32 %v556, 4294901760
    %v784 = vsub.f32 %v556, %v783
    %v785 = vand.u32 %v784, 4294901760
    %v786 = vsub.f32 %v784, %v785
    %v787 = vand.u32 %v786, 4294901760
    %788 = vmatpush1.msra.mxu0 %v787
    %v789 = vand.u32 %v559, 4294901760
    %v790 = vsub.f32 %v559, %v789
    %v791 = vand.u32 %v790, 4294901760
    %v792 = vsub.f32 %v790, %v791
    %v793 = vand.u32 %v792, 4294901760
    %794 = vmatprep.subr.mxu0 %v793
    %v795 = vand.u32 %v558, 4294901760
    %v796 = vsub.f32 %v558, %v795
    %v797 = vand.u32 %v796, 4294901760
    %v798 = vsub.f32 %v796, %v797
    %v799 = vand.u32 %v798, 4294901760
    %800 = vmatpush1.msra.mxu0 %v799
    %v801 = vand.u32 %v561, 4294901760
    %v802 = vsub.f32 %v561, %v801
    %v803 = vand.u32 %v802, 4294901760
    %v804 = vsub.f32 %v802, %v803
    %v805 = vand.u32 %v804, 4294901760
    %806 = vmatprep.subr.mxu0 %v805
    %v807 = vand.u32 %v560, 4294901760
    %v808 = vsub.f32 %v560, %v807
    %v809 = vand.u32 %v808, 4294901760
    %v810 = vsub.f32 %v808, %v809
    %v811 = vand.u32 %v810, 4294901760
    %812 = vmatpush1.msra.mxu0 %v811
    %v813 = vand.u32 %v563, 4294901760
    %v814 = vsub.f32 %v563, %v813
    %v815 = vand.u32 %v814, 4294901760
    %v816 = vsub.f32 %v814, %v815
    %v817 = vand.u32 %v816, 4294901760
    %818 = vmatprep.subr.mxu0 %v817
    %v819 = vand.u32 %v562, 4294901760
    %v820 = vsub.f32 %v562, %v819
    %v821 = vand.u32 %v820, 4294901760
    %v822 = vsub.f32 %v820, %v821
    %v823 = vand.u32 %v822, 4294901760
    %824 = vmatpush1.msra.mxu0 %v823
    %v825 = vand.u32 %v565, 4294901760
    %v826 = vsub.f32 %v565, %v825
    %v827 = vand.u32 %v826, 4294901760
    %v828 = vsub.f32 %v826, %v827
    %v829 = vand.u32 %v828, 4294901760
    %830 = vmatprep.subr.mxu0 %v829
    %v831 = vand.u32 %v564, 4294901760
    %v832 = vsub.f32 %v564, %v831
    %v833 = vand.u32 %v832, 4294901760
    %v834 = vsub.f32 %v832, %v833
    %v835 = vand.u32 %v834, 4294901760
    %836 = vmatpush1.msra.mxu0 %v835
    %v837 = vand.u32 %v567, 4294901760
    %v838 = vsub.f32 %v567, %v837
    %v839 = vand.u32 %v838, 4294901760
    %v840 = vsub.f32 %v838, %v839
    %v841 = vand.u32 %v840, 4294901760
    %842 = vmatprep.subr.mxu0 %v841
    %v843 = vand.u32 %v566, 4294901760
    %v844 = vsub.f32 %v566, %v843
    %v845 = vand.u32 %v844, 4294901760
    %v846 = vsub.f32 %v844, %v845
    %v847 = vand.u32 %v846, 4294901760
    %848 = vmatpush1.msra.mxu0 %v847
    %v849 = vand.u32 %v569, 4294901760
    %v850 = vsub.f32 %v569, %v849
    %v851 = vand.u32 %v850, 4294901760
    %v852 = vsub.f32 %v850, %v851
    %v853 = vand.u32 %v852, 4294901760
    %854 = vmatprep.subr.mxu0 %v853
    %v855 = vand.u32 %v568, 4294901760
    %v856 = vsub.f32 %v568, %v855
    %v857 = vand.u32 %v856, 4294901760
    %v858 = vsub.f32 %v856, %v857
    %v859 = vand.u32 %v858, 4294901760
    %860 = vmatpush1.msra.mxu0 %v859
    %v861 = vand.u32 %v571, 4294901760
    %v862 = vsub.f32 %v571, %v861
    %v863 = vand.u32 %v862, 4294901760
    %v864 = vsub.f32 %v862, %v863
    %v865 = vand.u32 %v864, 4294901760
    %866 = vmatprep.subr.mxu0 %v865
    %v867 = vand.u32 %v570, 4294901760
    %v868 = vsub.f32 %v570, %v867
    %v869 = vand.u32 %v868, 4294901760
    %v870 = vsub.f32 %v868, %v869
    %v871 = vand.u32 %v870, 4294901760
    %872 = vmatpush1.msra.mxu0 %v871
    %v873 = vand.u32 %v573, 4294901760
    %v874 = vsub.f32 %v573, %v873
    %v875 = vand.u32 %v874, 4294901760
    %v876 = vsub.f32 %v874, %v875
    %v877 = vand.u32 %v876, 4294901760
    %878 = vmatprep.subr.mxu0 %v877
    %v879 = vand.u32 %v572, 4294901760
    %v880 = vsub.f32 %v572, %v879
    %v881 = vand.u32 %v880, 4294901760
    %v882 = vsub.f32 %v880, %v881
    %v883 = vand.u32 %v882, 4294901760
    %884 = vmatpush1.msra.mxu0 %v883
    %v885 = vand.u32 %v575, 4294901760
    %v886 = vsub.f32 %v575, %v885
    %v887 = vand.u32 %v886, 4294901760
    %v888 = vsub.f32 %v886, %v887
    %v889 = vand.u32 %v888, 4294901760
    %890 = vmatprep.subr.mxu0 %v889
    %v891 = vand.u32 %v574, 4294901760
    %v892 = vsub.f32 %v574, %v891
    %v893 = vand.u32 %v892, 4294901760
    %v894 = vsub.f32 %v892, %v893
    %v895 = vand.u32 %v894, 4294901760
    %896 = vmatpush1.msra.mxu0 %v895
    %v897 = vand.u32 %v577, 4294901760
    %v898 = vsub.f32 %v577, %v897
    %v899 = vand.u32 %v898, 4294901760
    %v900 = vsub.f32 %v898, %v899
    %v901 = vand.u32 %v900, 4294901760
    %902 = vmatprep.subr.mxu0 %v901
    %v903 = vand.u32 %v576, 4294901760
    %v904 = vsub.f32 %v576, %v903
    %v905 = vand.u32 %v904, 4294901760
    %v906 = vsub.f32 %v904, %v905
    %v907 = vand.u32 %v906, 4294901760
    %908 = vmatpush1.msra.mxu0 %v907
    %v909 = vand.u32 %v579, 4294901760
    %v910 = vsub.f32 %v579, %v909
    %v911 = vand.u32 %v910, 4294901760
    %v912 = vsub.f32 %v910, %v911
    %v913 = vand.u32 %v912, 4294901760
    %914 = vmatprep.subr.mxu0 %v913
    %v915 = vand.u32 %v578, 4294901760
    %v916 = vsub.f32 %v578, %v915
    %v917 = vand.u32 %v916, 4294901760
    %v918 = vsub.f32 %v916, %v917
    %v919 = vand.u32 %v918, 4294901760
    %920 = vmatpush1.msra.mxu0 %v919
    %v921 = vand.u32 %v581, 4294901760
    %v922 = vsub.f32 %v581, %v921
    %v923 = vand.u32 %v922, 4294901760
    %v924 = vsub.f32 %v922, %v923
    %v925 = vand.u32 %v924, 4294901760
    %926 = vmatprep.subr.mxu0 %v925
    %v927 = vand.u32 %v580, 4294901760
    %v928 = vsub.f32 %v580, %v927
    %v929 = vand.u32 %v928, 4294901760
    %v930 = vsub.f32 %v928, %v929
    %v931 = vand.u32 %v930, 4294901760
    %932 = vmatpush1.msra.mxu0 %v931
    %v933 = vand.u32 %v583, 4294901760
    %v934 = vsub.f32 %v583, %v933
    %v935 = vand.u32 %v934, 4294901760
    %v936 = vsub.f32 %v934, %v935
    %v937 = vand.u32 %v936, 4294901760
    %938 = vmatprep.subr.mxu0 %v937
    %v939 = vand.u32 %v582, 4294901760
    %v940 = vsub.f32 %v582, %v939
    %v941 = vand.u32 %v940, 4294901760
    %v942 = vsub.f32 %v940, %v941
    %v943 = vand.u32 %v942, 4294901760
    %944 = vmatpush1.msra.mxu0 %v943
    %v945 = vand.u32 %v585, 4294901760
    %v946 = vsub.f32 %v585, %v945
    %v947 = vand.u32 %v946, 4294901760
    %v948 = vsub.f32 %v946, %v947
    %v949 = vand.u32 %v948, 4294901760
    %950 = vmatprep.subr.mxu0 %v949
    %v951 = vand.u32 %v584, 4294901760
    %v952 = vsub.f32 %v584, %v951
    %v953 = vand.u32 %v952, 4294901760
    %v954 = vsub.f32 %v952, %v953
    %v955 = vand.u32 %v954, 4294901760
    %956 = vmatpush1.msra.mxu0 %v955
    %v957 = vand.u32 %v587, 4294901760
    %v958 = vsub.f32 %v587, %v957
    %v959 = vand.u32 %v958, 4294901760
    %v960 = vsub.f32 %v958, %v959
    %v961 = vand.u32 %v960, 4294901760
    %962 = vmatprep.subr.mxu0 %v961
    %v963 = vand.u32 %v586, 4294901760
    %v964 = vsub.f32 %v586, %v963
    %v965 = vand.u32 %v964, 4294901760
    %v966 = vsub.f32 %v964, %v965
    %v967 = vand.u32 %v966, 4294901760
    %968 = vmatpush1.msra.mxu0 %v967
    %v969 = vand.u32 %v589, 4294901760
    %v970 = vsub.f32 %v589, %v969
    %v971 = vand.u32 %v970, 4294901760
    %v972 = vsub.f32 %v970, %v971
    %v973 = vand.u32 %v972, 4294901760
    %974 = vmatprep.subr.mxu0 %v973
    %v975 = vand.u32 %v588, 4294901760
    %v976 = vsub.f32 %v588, %v975
    %v977 = vand.u32 %v976, 4294901760
    %v978 = vsub.f32 %v976, %v977
    %v979 = vand.u32 %v978, 4294901760
    %980 = vmatpush1.msra.mxu0 %v979
    %v981 = vand.u32 %v591, 4294901760
    %v982 = vsub.f32 %v591, %v981
    %v983 = vand.u32 %v982, 4294901760
    %v984 = vsub.f32 %v982, %v983
    %v985 = vand.u32 %v984, 4294901760
    %986 = vmatprep.subr.mxu0 %v985
    %v987 = vand.u32 %v590, 4294901760
    %v988 = vsub.f32 %v590, %v987
    %v989 = vand.u32 %v988, 4294901760
    %v990 = vsub.f32 %v988, %v989
    %v991 = vand.u32 %v990, 4294901760
    %992 = vmatpush1.msra.mxu0 %v991
    %v993 = vand.u32 %v593, 4294901760
    %v994 = vsub.f32 %v593, %v993
    %v995 = vand.u32 %v994, 4294901760
    %v996 = vsub.f32 %v994, %v995
    %v997 = vand.u32 %v996, 4294901760
    %998 = vmatprep.subr.mxu0 %v997
    %v999 = vand.u32 %v592, 4294901760
    %v1000 = vsub.f32 %v592, %v999
    %v1001 = vand.u32 %v1000, 4294901760
    %v1002 = vsub.f32 %v1000, %v1001
    %v1003 = vand.u32 %v1002, 4294901760
    %1004 = vmatpush1.msra.mxu0 %v1003
    %v1005 = vand.u32 %v595, 4294901760
    %v1006 = vsub.f32 %v595, %v1005
    %v1007 = vand.u32 %v1006, 4294901760
    %v1008 = vsub.f32 %v1006, %v1007
    %v1009 = vand.u32 %v1008, 4294901760
    %1010 = vmatprep.subr.mxu0 %v1009
    %v1011 = vand.u32 %v594, 4294901760
    %v1012 = vsub.f32 %v594, %v1011
    %v1013 = vand.u32 %v1012, 4294901760
    %v1014 = vsub.f32 %v1012, %v1013
    %v1015 = vand.u32 %v1014, 4294901760
    %1016 = vmatpush1.msra.mxu0 %v1015
    %v1017 = vand.u32 %v597, 4294901760
    %v1018 = vsub.f32 %v597, %v1017
    %v1019 = vand.u32 %v1018, 4294901760
    %v1020 = vsub.f32 %v1018, %v1019
    %v1021 = vand.u32 %v1020, 4294901760
    %1022 = vmatprep.subr.mxu0 %v1021
    %v1023 = vand.u32 %v596, 4294901760
    %v1024 = vsub.f32 %v596, %v1023
    %v1025 = vand.u32 %v1024, 4294901760
    %v1026 = vsub.f32 %v1024, %v1025
    %v1027 = vand.u32 %v1026, 4294901760
    %1028 = vmatpush1.msra.mxu0 %v1027
    %v1029 = vand.u32 %v599, 4294901760
    %v1030 = vsub.f32 %v599, %v1029
    %v1031 = vand.u32 %v1030, 4294901760
    %v1032 = vsub.f32 %v1030, %v1031
    %v1033 = vand.u32 %v1032, 4294901760
    %1034 = vmatprep.subr.mxu0 %v1033
    %v1035 = vand.u32 %v598, 4294901760
    %v1036 = vsub.f32 %v598, %v1035
    %v1037 = vand.u32 %v1036, 4294901760
    %v1038 = vsub.f32 %v1036, %v1037
    %v1039 = vand.u32 %v1038, 4294901760
    %1040 = vmatpush1.msra.mxu0 %v1039
    %v1041 = vand.u32 %v601, 4294901760
    %v1042 = vsub.f32 %v601, %v1041
    %v1043 = vand.u32 %v1042, 4294901760
    %v1044 = vsub.f32 %v1042, %v1043
    %v1045 = vand.u32 %v1044, 4294901760
    %1046 = vmatprep.subr.mxu0 %v1045
    %v1047 = vand.u32 %v600, 4294901760
    %v1048 = vsub.f32 %v600, %v1047
    %v1049 = vand.u32 %v1048, 4294901760
    %v1050 = vsub.f32 %v1048, %v1049
    %v1051 = vand.u32 %v1050, 4294901760
    %1052 = vmatpush1.msra.mxu0 %v1051
    %v1053 = vand.u32 %v603, 4294901760
    %v1054 = vsub.f32 %v603, %v1053
    %v1055 = vand.u32 %v1054, 4294901760
    %v1056 = vsub.f32 %v1054, %v1055
    %v1057 = vand.u32 %v1056, 4294901760
    %1058 = vmatprep.subr.mxu0 %v1057
    %v1059 = vand.u32 %v602, 4294901760
    %v1060 = vsub.f32 %v602, %v1059
    %v1061 = vand.u32 %v1060, 4294901760
    %v1062 = vsub.f32 %v1060, %v1061
    %v1063 = vand.u32 %v1062, 4294901760
    %1064 = vmatpush1.msra.mxu0 %v1063
    %v1065 = vand.u32 %v605, 4294901760
    %v1066 = vsub.f32 %v605, %v1065
    %v1067 = vand.u32 %v1066, 4294901760
    %v1068 = vsub.f32 %v1066, %v1067
    %v1069 = vand.u32 %v1068, 4294901760
    %1070 = vmatprep.subr.mxu0 %v1069
    %v1071 = vand.u32 %v604, 4294901760
    %v1072 = vsub.f32 %v604, %v1071
    %v1073 = vand.u32 %v1072, 4294901760
    %v1074 = vsub.f32 %v1072, %v1073
    %v1075 = vand.u32 %v1074, 4294901760
    %1076 = vmatpush1.msra.mxu0 %v1075
    %v1077 = vand.u32 %v607, 4294901760
    %v1078 = vsub.f32 %v607, %v1077
    %v1079 = vand.u32 %v1078, 4294901760
    %v1080 = vsub.f32 %v1078, %v1079
    %v1081 = vand.u32 %v1080, 4294901760
    %1082 = vmatprep.subr.mxu0 %v1081
    %v1083 = vand.u32 %v606, 4294901760
    %v1084 = vsub.f32 %v606, %v1083
    %v1085 = vand.u32 %v1084, 4294901760
    %v1086 = vsub.f32 %v1084, %v1085
    %v1087 = vand.u32 %v1086, 4294901760
    %1088 = vmatpush1.msra.mxu0 %v1087
    %v1089 = vand.u32 %v609, 4294901760
    %v1090 = vsub.f32 %v609, %v1089
    %v1091 = vand.u32 %v1090, 4294901760
    %v1092 = vsub.f32 %v1090, %v1091
    %v1093 = vand.u32 %v1092, 4294901760
    %1094 = vmatprep.subr.mxu0 %v1093
    %v1095 = vand.u32 %v608, 4294901760
    %v1096 = vsub.f32 %v608, %v1095
    %v1097 = vand.u32 %v1096, 4294901760
    %v1098 = vsub.f32 %v1096, %v1097
    %v1099 = vand.u32 %v1098, 4294901760
    %1100 = vmatpush1.msra.mxu0 %v1099
    %v1101 = vand.u32 %v611, 4294901760
    %v1102 = vsub.f32 %v611, %v1101
    %v1103 = vand.u32 %v1102, 4294901760
    %v1104 = vsub.f32 %v1102, %v1103
    %v1105 = vand.u32 %v1104, 4294901760
    %1106 = vmatprep.subr.mxu0 %v1105
    %v1107 = vand.u32 %v610, 4294901760
    %v1108 = vsub.f32 %v610, %v1107
    %v1109 = vand.u32 %v1108, 4294901760
    %v1110 = vsub.f32 %v1108, %v1109
    %v1111 = vand.u32 %v1110, 4294901760
    %1112 = vmatpush1.msra.mxu0 %v1111
    %v1113 = vand.u32 %v613, 4294901760
    %v1114 = vsub.f32 %v613, %v1113
    %v1115 = vand.u32 %v1114, 4294901760
    %v1116 = vsub.f32 %v1114, %v1115
    %v1117 = vand.u32 %v1116, 4294901760
    %1118 = vmatprep.subr.mxu0 %v1117
    %v1119 = vand.u32 %v612, 4294901760
    %v1120 = vsub.f32 %v612, %v1119
    %v1121 = vand.u32 %v1120, 4294901760
    %v1122 = vsub.f32 %v1120, %v1121
    %v1123 = vand.u32 %v1122, 4294901760
    %1124 = vmatpush1.msra.mxu0 %v1123
    %v1125 = vand.u32 %v615, 4294901760
    %v1126 = vsub.f32 %v615, %v1125
    %v1127 = vand.u32 %v1126, 4294901760
    %v1128 = vsub.f32 %v1126, %v1127
    %v1129 = vand.u32 %v1128, 4294901760
    %1130 = vmatprep.subr.mxu0 %v1129
    %v1131 = vand.u32 %v614, 4294901760
    %v1132 = vsub.f32 %v614, %v1131
    %v1133 = vand.u32 %v1132, 4294901760
    %v1134 = vsub.f32 %v1132, %v1133
    %v1135 = vand.u32 %v1134, 4294901760
    %1136 = vmatpush1.msra.mxu0 %v1135
    %v1137 = vand.u32 %v617, 4294901760
    %v1138 = vsub.f32 %v617, %v1137
    %v1139 = vand.u32 %v1138, 4294901760
    %v1140 = vsub.f32 %v1138, %v1139
    %v1141 = vand.u32 %v1140, 4294901760
    %1142 = vmatprep.subr.mxu0 %v1141
    %v1143 = vand.u32 %v616, 4294901760
    %v1144 = vsub.f32 %v616, %v1143
    %v1145 = vand.u32 %v1144, 4294901760
    %v1146 = vsub.f32 %v1144, %v1145
    %v1147 = vand.u32 %v1146, 4294901760
    %1148 = vmatpush1.msra.mxu0 %v1147
    %v1149 = vand.u32 %v619, 4294901760
    %v1150 = vsub.f32 %v619, %v1149
    %v1151 = vand.u32 %v1150, 4294901760
    %v1152 = vsub.f32 %v1150, %v1151
    %v1153 = vand.u32 %v1152, 4294901760
    %1154 = vmatprep.subr.mxu0 %v1153
    %v1155 = vand.u32 %v618, 4294901760
    %v1156 = vsub.f32 %v618, %v1155
    %v1157 = vand.u32 %v1156, 4294901760
    %v1158 = vsub.f32 %v1156, %v1157
    %v1159 = vand.u32 %v1158, 4294901760
    %1160 = vmatpush1.msra.mxu0 %v1159
    %v1161 = vand.u32 %v555, 4294901760
    %1162 = vmatprep.mubr.f32.mxu0 %v1161
    %v1163 = vand.u32 %v554, 4294901760
    %1164 = vmatmul.mubr.f32.gmra.mrb[0].mxu0 %v1163
    %v1165 = vpop.f32.mrb[0].mxu0
    %v1166 = vadd.f32 %v773, %v1165
    %v1167 = vpop.f32.mrb[0].mxu0
    %v1168 = vadd.f32 %v775, %v1167
    %1169 = vdwg.mxu0
    %v1170 = vand.u32 %v557, 4294901760
    %v1171 = vsub.f32 %v557, %v1170
    %1172 = vmatprep.subr.mxu0 %v1171
    %v1173 = vand.u32 %v556, 4294901760
    %v1174 = vsub.f32 %v556, %v1173
    %1175 = vmatpush1.msra.mxu0 %v1174
    %v1176 = vand.u32 %v559, 4294901760
    %v1177 = vsub.f32 %v559, %v1176
    %1178 = vmatprep.subr.mxu0 %v1177
    %v1179 = vand.u32 %v558, 4294901760
    %v1180 = vsub.f32 %v558, %v1179
    %1181 = vmatpush1.msra.mxu0 %v1180
    %v1182 = vand.u32 %v561, 4294901760
    %v1183 = vsub.f32 %v561, %v1182
    %1184 = vmatprep.subr.mxu0 %v1183
    %v1185 = vand.u32 %v560, 4294901760
    %v1186 = vsub.f32 %v560, %v1185
    %1187 = vmatpush1.msra.mxu0 %v1186
    %v1188 = vand.u32 %v563, 4294901760
    %v1189 = vsub.f32 %v563, %v1188
    %1190 = vmatprep.subr.mxu0 %v1189
    %v1191 = vand.u32 %v562, 4294901760
    %v1192 = vsub.f32 %v562, %v1191
    %1193 = vmatpush1.msra.mxu0 %v1192
    %v1194 = vand.u32 %v565, 4294901760
    %v1195 = vsub.f32 %v565, %v1194
    %1196 = vmatprep.subr.mxu0 %v1195
    %v1197 = vand.u32 %v564, 4294901760
    %v1198 = vsub.f32 %v564, %v1197
    %1199 = vmatpush1.msra.mxu0 %v1198
    %v1200 = vand.u32 %v567, 4294901760
    %v1201 = vsub.f32 %v567, %v1200
    %1202 = vmatprep.subr.mxu0 %v1201
    %v1203 = vand.u32 %v566, 4294901760
    %v1204 = vsub.f32 %v566, %v1203
    %1205 = vmatpush1.msra.mxu0 %v1204
    %v1206 = vand.u32 %v569, 4294901760
    %v1207 = vsub.f32 %v569, %v1206
    %1208 = vmatprep.subr.mxu0 %v1207
    %v1209 = vand.u32 %v568, 4294901760
    %v1210 = vsub.f32 %v568, %v1209
    %1211 = vmatpush1.msra.mxu0 %v1210
    %v1212 = vand.u32 %v571, 4294901760
    %v1213 = vsub.f32 %v571, %v1212
    %1214 = vmatprep.subr.mxu0 %v1213
    %v1215 = vand.u32 %v570, 4294901760
    %v1216 = vsub.f32 %v570, %v1215
    %1217 = vmatpush1.msra.mxu0 %v1216
    %v1218 = vand.u32 %v573, 4294901760
    %v1219 = vsub.f32 %v573, %v1218
    %1220 = vmatprep.subr.mxu0 %v1219
    %v1221 = vand.u32 %v572, 4294901760
    %v1222 = vsub.f32 %v572, %v1221
    %1223 = vmatpush1.msra.mxu0 %v1222
    %v1224 = vand.u32 %v575, 4294901760
    %v1225 = vsub.f32 %v575, %v1224
    %1226 = vmatprep.subr.mxu0 %v1225
    %v1227 = vand.u32 %v574, 4294901760
    %v1228 = vsub.f32 %v574, %v1227
    %1229 = vmatpush1.msra.mxu0 %v1228
    %v1230 = vand.u32 %v577, 4294901760
    %v1231 = vsub.f32 %v577, %v1230
    %1232 = vmatprep.subr.mxu0 %v1231
    %v1233 = vand.u32 %v576, 4294901760
    %v1234 = vsub.f32 %v576, %v1233
    %1235 = vmatpush1.msra.mxu0 %v1234
    %v1236 = vand.u32 %v579, 4294901760
    %v1237 = vsub.f32 %v579, %v1236
    %1238 = vmatprep.subr.mxu0 %v1237
    %v1239 = vand.u32 %v578, 4294901760
    %v1240 = vsub.f32 %v578, %v1239
    %1241 = vmatpush1.msra.mxu0 %v1240
    %v1242 = vand.u32 %v581, 4294901760
    %v1243 = vsub.f32 %v581, %v1242
    %1244 = vmatprep.subr.mxu0 %v1243
    %v1245 = vand.u32 %v580, 4294901760
    %v1246 = vsub.f32 %v580, %v1245
    %1247 = vmatpush1.msra.mxu0 %v1246
    %v1248 = vand.u32 %v583, 4294901760
    %v1249 = vsub.f32 %v583, %v1248
    %1250 = vmatprep.subr.mxu0 %v1249
    %v1251 = vand.u32 %v582, 4294901760
    %v1252 = vsub.f32 %v582, %v1251
    %1253 = vmatpush1.msra.mxu0 %v1252
    %v1254 = vand.u32 %v585, 4294901760
    %v1255 = vsub.f32 %v585, %v1254
    %1256 = vmatprep.subr.mxu0 %v1255
    %v1257 = vand.u32 %v584, 4294901760
    %v1258 = vsub.f32 %v584, %v1257
    %1259 = vmatpush1.msra.mxu0 %v1258
    %v1260 = vand.u32 %v587, 4294901760
    %v1261 = vsub.f32 %v587, %v1260
    %1262 = vmatprep.subr.mxu0 %v1261
    %v1263 = vand.u32 %v586, 4294901760
    %v1264 = vsub.f32 %v586, %v1263
    %1265 = vmatpush1.msra.mxu0 %v1264
    %v1266 = vand.u32 %v589, 4294901760
    %v1267 = vsub.f32 %v589, %v1266
    %1268 = vmatprep.subr.mxu0 %v1267
    %v1269 = vand.u32 %v588, 4294901760
    %v1270 = vsub.f32 %v588, %v1269
    %1271 = vmatpush1.msra.mxu0 %v1270
    %v1272 = vand.u32 %v591, 4294901760
    %v1273 = vsub.f32 %v591, %v1272
    %1274 = vmatprep.subr.mxu0 %v1273
    %v1275 = vand.u32 %v590, 4294901760
    %v1276 = vsub.f32 %v590, %v1275
    %1277 = vmatpush1.msra.mxu0 %v1276
    %v1278 = vand.u32 %v593, 4294901760
    %v1279 = vsub.f32 %v593, %v1278
    %1280 = vmatprep.subr.mxu0 %v1279
    %v1281 = vand.u32 %v592, 4294901760
    %v1282 = vsub.f32 %v592, %v1281
    %1283 = vmatpush1.msra.mxu0 %v1282
    %v1284 = vand.u32 %v595, 4294901760
    %v1285 = vsub.f32 %v595, %v1284
    %1286 = vmatprep.subr.mxu0 %v1285
    %v1287 = vand.u32 %v594, 4294901760
    %v1288 = vsub.f32 %v594, %v1287
    %1289 = vmatpush1.msra.mxu0 %v1288
    %v1290 = vand.u32 %v597, 4294901760
    %v1291 = vsub.f32 %v597, %v1290
    %1292 = vmatprep.subr.mxu0 %v1291
    %v1293 = vand.u32 %v596, 4294901760
    %v1294 = vsub.f32 %v596, %v1293
    %1295 = vmatpush1.msra.mxu0 %v1294
    %v1296 = vand.u32 %v599, 4294901760
    %v1297 = vsub.f32 %v599, %v1296
    %1298 = vmatprep.subr.mxu0 %v1297
    %v1299 = vand.u32 %v598, 4294901760
    %v1300 = vsub.f32 %v598, %v1299
    %1301 = vmatpush1.msra.mxu0 %v1300
    %v1302 = vand.u32 %v601, 4294901760
    %v1303 = vsub.f32 %v601, %v1302
    %1304 = vmatprep.subr.mxu0 %v1303
    %v1305 = vand.u32 %v600, 4294901760
    %v1306 = vsub.f32 %v600, %v1305
    %1307 = vmatpush1.msra.mxu0 %v1306
    %v1308 = vand.u32 %v603, 4294901760
    %v1309 = vsub.f32 %v603, %v1308
    %1310 = vmatprep.subr.mxu0 %v1309
    %v1311 = vand.u32 %v602, 4294901760
    %v1312 = vsub.f32 %v602, %v1311
    %1313 = vmatpush1.msra.mxu0 %v1312
    %v1314 = vand.u32 %v605, 4294901760
    %v1315 = vsub.f32 %v605, %v1314
    %1316 = vmatprep.subr.mxu0 %v1315
    %v1317 = vand.u32 %v604, 4294901760
    %v1318 = vsub.f32 %v604, %v1317
    %1319 = vmatpush1.msra.mxu0 %v1318
    %v1320 = vand.u32 %v607, 4294901760
    %v1321 = vsub.f32 %v607, %v1320
    %1322 = vmatprep.subr.mxu0 %v1321
    %v1323 = vand.u32 %v606, 4294901760
    %v1324 = vsub.f32 %v606, %v1323
    %1325 = vmatpush1.msra.mxu0 %v1324
    %v1326 = vand.u32 %v609, 4294901760
    %v1327 = vsub.f32 %v609, %v1326
    %1328 = vmatprep.subr.mxu0 %v1327
    %v1329 = vand.u32 %v608, 4294901760
    %v1330 = vsub.f32 %v608, %v1329
    %1331 = vmatpush1.msra.mxu0 %v1330
    %v1332 = vand.u32 %v611, 4294901760
    %v1333 = vsub.f32 %v611, %v1332
    %1334 = vmatprep.subr.mxu0 %v1333
    %v1335 = vand.u32 %v610, 4294901760
    %v1336 = vsub.f32 %v610, %v1335
    %1337 = vmatpush1.msra.mxu0 %v1336
    %v1338 = vand.u32 %v613, 4294901760
    %v1339 = vsub.f32 %v613, %v1338
    %1340 = vmatprep.subr.mxu0 %v1339
    %v1341 = vand.u32 %v612, 4294901760
    %v1342 = vsub.f32 %v612, %v1341
    %1343 = vmatpush1.msra.mxu0 %v1342
    %v1344 = vand.u32 %v615, 4294901760
    %v1345 = vsub.f32 %v615, %v1344
    %1346 = vmatprep.subr.mxu0 %v1345
    %v1347 = vand.u32 %v614, 4294901760
    %v1348 = vsub.f32 %v614, %v1347
    %1349 = vmatpush1.msra.mxu0 %v1348
    %v1350 = vand.u32 %v617, 4294901760
    %v1351 = vsub.f32 %v617, %v1350
    %1352 = vmatprep.subr.mxu0 %v1351
    %v1353 = vand.u32 %v616, 4294901760
    %v1354 = vsub.f32 %v616, %v1353
    %1355 = vmatpush1.msra.mxu0 %v1354
    %v1356 = vand.u32 %v619, 4294901760
    %v1357 = vsub.f32 %v619, %v1356
    %1358 = vmatprep.subr.mxu0 %v1357
    %v1359 = vand.u32 %v618, 4294901760
    %v1360 = vsub.f32 %v618, %v1359
    %1361 = vmatpush1.msra.mxu0 %v1360
    %v1362 = vand.u32 %v555, 4294901760
    %v1363 = vsub.f32 %v555, %v1362
    %1364 = vmatprep.mubr.f32.mxu0 %v1363
    %v1365 = vand.u32 %v554, 4294901760
    %v1366 = vsub.f32 %v554, %v1365
    %1367 = vmatmul.mubr.f32.gmra.mrb[0].mxu0 %v1366
    %v1368 = vpop.f32.mrb[0].mxu0
    %v1369 = vadd.f32 %v1166, %v1368
    %v1370 = vpop.f32.mrb[0].mxu0
    %v1371 = vadd.f32 %v1168, %v1370
    %1372 = vdwg.mxu0
    %v1373 = vand.u32 %v557, 4294901760
    %1374 = vmatprep.subr.mxu0 %v1373
    %v1375 = vand.u32 %v556, 4294901760
    %1376 = vmatpush1.msra.mxu0 %v1375
    %v1377 = vand.u32 %v559, 4294901760
    %1378 = vmatprep.subr.mxu0 %v1377
    %v1379 = vand.u32 %v558, 4294901760
    %1380 = vmatpush1.msra.mxu0 %v1379
    %v1381 = vand.u32 %v561, 4294901760
    %1382 = vmatprep.subr.mxu0 %v1381
    %v1383 = vand.u32 %v560, 4294901760
    %1384 = vmatpush1.msra.mxu0 %v1383
    %v1385 = vand.u32 %v563, 4294901760
    %1386 = vmatprep.subr.mxu0 %v1385
    %v1387 = vand.u32 %v562, 4294901760
    %1388 = vmatpush1.msra.mxu0 %v1387
    %v1389 = vand.u32 %v565, 4294901760
    %1390 = vmatprep.subr.mxu0 %v1389
    %v1391 = vand.u32 %v564, 4294901760
    %1392 = vmatpush1.msra.mxu0 %v1391
    %v1393 = vand.u32 %v567, 4294901760
    %1394 = vmatprep.subr.mxu0 %v1393
    %v1395 = vand.u32 %v566, 4294901760
    %1396 = vmatpush1.msra.mxu0 %v1395
    %v1397 = vand.u32 %v569, 4294901760
    %1398 = vmatprep.subr.mxu0 %v1397
    %v1399 = vand.u32 %v568, 4294901760
    %1400 = vmatpush1.msra.mxu0 %v1399
    %v1401 = vand.u32 %v571, 4294901760
    %1402 = vmatprep.subr.mxu0 %v1401
    %v1403 = vand.u32 %v570, 4294901760
    %1404 = vmatpush1.msra.mxu0 %v1403
    %v1405 = vand.u32 %v573, 4294901760
    %1406 = vmatprep.subr.mxu0 %v1405
    %v1407 = vand.u32 %v572, 4294901760
    %1408 = vmatpush1.msra.mxu0 %v1407
    %v1409 = vand.u32 %v575, 4294901760
    %1410 = vmatprep.subr.mxu0 %v1409
    %v1411 = vand.u32 %v574, 4294901760
    %1412 = vmatpush1.msra.mxu0 %v1411
    %v1413 = vand.u32 %v577, 4294901760
    %1414 = vmatprep.subr.mxu0 %v1413
    %v1415 = vand.u32 %v576, 4294901760
    %1416 = vmatpush1.msra.mxu0 %v1415
    %v1417 = vand.u32 %v579, 4294901760
    %1418 = vmatprep.subr.mxu0 %v1417
    %v1419 = vand.u32 %v578, 4294901760
    %1420 = vmatpush1.msra.mxu0 %v1419
    %v1421 = vand.u32 %v581, 4294901760
    %1422 = vmatprep.subr.mxu0 %v1421
    %v1423 = vand.u32 %v580, 4294901760
    %1424 = vmatpush1.msra.mxu0 %v1423
    %v1425 = vand.u32 %v583, 4294901760
    %1426 = vmatprep.subr.mxu0 %v1425
    %v1427 = vand.u32 %v582, 4294901760
    %1428 = vmatpush1.msra.mxu0 %v1427
    %v1429 = vand.u32 %v585, 4294901760
    %1430 = vmatprep.subr.mxu0 %v1429
    %v1431 = vand.u32 %v584, 4294901760
    %1432 = vmatpush1.msra.mxu0 %v1431
    %v1433 = vand.u32 %v587, 4294901760
    %1434 = vmatprep.subr.mxu0 %v1433
    %v1435 = vand.u32 %v586, 4294901760
    %1436 = vmatpush1.msra.mxu0 %v1435
    %v1437 = vand.u32 %v589, 4294901760
    %1438 = vmatprep.subr.mxu0 %v1437
    %v1439 = vand.u32 %v588, 4294901760
    %1440 = vmatpush1.msra.mxu0 %v1439
    %v1441 = vand.u32 %v591, 4294901760
    %1442 = vmatprep.subr.mxu0 %v1441
    %v1443 = vand.u32 %v590, 4294901760
    %1444 = vmatpush1.msra.mxu0 %v1443
    %v1445 = vand.u32 %v593, 4294901760
    %1446 = vmatprep.subr.mxu0 %v1445
    %v1447 = vand.u32 %v592, 4294901760
    %1448 = vmatpush1.msra.mxu0 %v1447
    %v1449 = vand.u32 %v595, 4294901760
    %1450 = vmatprep.subr.mxu0 %v1449
    %v1451 = vand.u32 %v594, 4294901760
    %1452 = vmatpush1.msra.mxu0 %v1451
    %v1453 = vand.u32 %v597, 4294901760
    %1454 = vmatprep.subr.mxu0 %v1453
    %v1455 = vand.u32 %v596, 4294901760
    %1456 = vmatpush1.msra.mxu0 %v1455
    %v1457 = vand.u32 %v599, 4294901760
    %1458 = vmatprep.subr.mxu0 %v1457
    %v1459 = vand.u32 %v598, 4294901760
    %1460 = vmatpush1.msra.mxu0 %v1459
    %v1461 = vand.u32 %v601, 4294901760
    %1462 = vmatprep.subr.mxu0 %v1461
    %v1463 = vand.u32 %v600, 4294901760
    %1464 = vmatpush1.msra.mxu0 %v1463
    %v1465 = vand.u32 %v603, 4294901760
    %1466 = vmatprep.subr.mxu0 %v1465
    %v1467 = vand.u32 %v602, 4294901760
    %1468 = vmatpush1.msra.mxu0 %v1467
    %v1469 = vand.u32 %v605, 4294901760
    %1470 = vmatprep.subr.mxu0 %v1469
    %v1471 = vand.u32 %v604, 4294901760
    %1472 = vmatpush1.msra.mxu0 %v1471
    %v1473 = vand.u32 %v607, 4294901760
    %1474 = vmatprep.subr.mxu0 %v1473
    %v1475 = vand.u32 %v606, 4294901760
    %1476 = vmatpush1.msra.mxu0 %v1475
    %v1477 = vand.u32 %v609, 4294901760
    %1478 = vmatprep.subr.mxu0 %v1477
    %v1479 = vand.u32 %v608, 4294901760
    %1480 = vmatpush1.msra.mxu0 %v1479
    %v1481 = vand.u32 %v611, 4294901760
    %1482 = vmatprep.subr.mxu0 %v1481
    %v1483 = vand.u32 %v610, 4294901760
    %1484 = vmatpush1.msra.mxu0 %v1483
    %v1485 = vand.u32 %v613, 4294901760
    %1486 = vmatprep.subr.mxu0 %v1485
    %v1487 = vand.u32 %v612, 4294901760
    %1488 = vmatpush1.msra.mxu0 %v1487
    %v1489 = vand.u32 %v615, 4294901760
    %1490 = vmatprep.subr.mxu0 %v1489
    %v1491 = vand.u32 %v614, 4294901760
    %1492 = vmatpush1.msra.mxu0 %v1491
    %v1493 = vand.u32 %v617, 4294901760
    %1494 = vmatprep.subr.mxu0 %v1493
    %v1495 = vand.u32 %v616, 4294901760
    %1496 = vmatpush1.msra.mxu0 %v1495
    %v1497 = vand.u32 %v619, 4294901760
    %1498 = vmatprep.subr.mxu0 %v1497
    %v1499 = vand.u32 %v618, 4294901760
    %1500 = vmatpush1.msra.mxu0 %v1499
    %v1501 = vand.u32 %v555, 4294901760
    %v1502 = vsub.f32 %v555, %v1501
    %v1503 = vand.u32 %v1502, 4294901760
    %1504 = vmatprep.mubr.f32.mxu0 %v1503
    %v1505 = vand.u32 %v554, 4294901760
    %v1506 = vsub.f32 %v554, %v1505
    %v1507 = vand.u32 %v1506, 4294901760
    %1508 = vmatmul.mubr.f32.gmra.mrb[0].mxu0 %v1507
    %v1509 = vpop.f32.mrb[0].mxu0
    %v1510 = vadd.f32 %v1369, %v1509
    %v1511 = vpop.f32.mrb[0].mxu0
    %v1512 = vadd.f32 %v1371, %v1511
    %1513 = vdwg.mxu0
    %v1514 = vand.u32 %v557, 4294901760
    %v1515 = vsub.f32 %v557, %v1514
    %v1516 = vand.u32 %v1515, 4294901760
    %1517 = vmatprep.subr.mxu0 %v1516
    %v1518 = vand.u32 %v556, 4294901760
    %v1519 = vsub.f32 %v556, %v1518
    %v1520 = vand.u32 %v1519, 4294901760
    %1521 = vmatpush1.msra.mxu0 %v1520
    %v1522 = vand.u32 %v559, 4294901760
    %v1523 = vsub.f32 %v559, %v1522
    %v1524 = vand.u32 %v1523, 4294901760
    %1525 = vmatprep.subr.mxu0 %v1524
    %v1526 = vand.u32 %v558, 4294901760
    %v1527 = vsub.f32 %v558, %v1526
    %v1528 = vand.u32 %v1527, 4294901760
    %1529 = vmatpush1.msra.mxu0 %v1528
    %v1530 = vand.u32 %v561, 4294901760
    %v1531 = vsub.f32 %v561, %v1530
    %v1532 = vand.u32 %v1531, 4294901760
    %1533 = vmatprep.subr.mxu0 %v1532
    %v1534 = vand.u32 %v560, 4294901760
    %v1535 = vsub.f32 %v560, %v1534
    %v1536 = vand.u32 %v1535, 4294901760
    %1537 = vmatpush1.msra.mxu0 %v1536
    %v1538 = vand.u32 %v563, 4294901760
    %v1539 = vsub.f32 %v563, %v1538
    %v1540 = vand.u32 %v1539, 4294901760
    %1541 = vmatprep.subr.mxu0 %v1540
    %v1542 = vand.u32 %v562, 4294901760
    %v1543 = vsub.f32 %v562, %v1542
    %v1544 = vand.u32 %v1543, 4294901760
    %1545 = vmatpush1.msra.mxu0 %v1544
    %v1546 = vand.u32 %v565, 4294901760
    %v1547 = vsub.f32 %v565, %v1546
    %v1548 = vand.u32 %v1547, 4294901760
    %1549 = vmatprep.subr.mxu0 %v1548
    %v1550 = vand.u32 %v564, 4294901760
    %v1551 = vsub.f32 %v564, %v1550
    %v1552 = vand.u32 %v1551, 4294901760
    %1553 = vmatpush1.msra.mxu0 %v1552
    %v1554 = vand.u32 %v567, 4294901760
    %v1555 = vsub.f32 %v567, %v1554
    %v1556 = vand.u32 %v1555, 4294901760
    %1557 = vmatprep.subr.mxu0 %v1556
    %v1558 = vand.u32 %v566, 4294901760
    %v1559 = vsub.f32 %v566, %v1558
    %v1560 = vand.u32 %v1559, 4294901760
    %1561 = vmatpush1.msra.mxu0 %v1560
    %v1562 = vand.u32 %v569, 4294901760
    %v1563 = vsub.f32 %v569, %v1562
    %v1564 = vand.u32 %v1563, 4294901760
    %1565 = vmatprep.subr.mxu0 %v1564
    %v1566 = vand.u32 %v568, 4294901760
    %v1567 = vsub.f32 %v568, %v1566
    %v1568 = vand.u32 %v1567, 4294901760
    %1569 = vmatpush1.msra.mxu0 %v1568
    %v1570 = vand.u32 %v571, 4294901760
    %v1571 = vsub.f32 %v571, %v1570
    %v1572 = vand.u32 %v1571, 4294901760
    %1573 = vmatprep.subr.mxu0 %v1572
    %v1574 = vand.u32 %v570, 4294901760
    %v1575 = vsub.f32 %v570, %v1574
    %v1576 = vand.u32 %v1575, 4294901760
    %1577 = vmatpush1.msra.mxu0 %v1576
    %v1578 = vand.u32 %v573, 4294901760
    %v1579 = vsub.f32 %v573, %v1578
    %v1580 = vand.u32 %v1579, 4294901760
    %1581 = vmatprep.subr.mxu0 %v1580
    %v1582 = vand.u32 %v572, 4294901760
    %v1583 = vsub.f32 %v572, %v1582
    %v1584 = vand.u32 %v1583, 4294901760
    %1585 = vmatpush1.msra.mxu0 %v1584
    %v1586 = vand.u32 %v575, 4294901760
    %v1587 = vsub.f32 %v575, %v1586
    %v1588 = vand.u32 %v1587, 4294901760
    %1589 = vmatprep.subr.mxu0 %v1588
    %v1590 = vand.u32 %v574, 4294901760
    %v1591 = vsub.f32 %v574, %v1590
    %v1592 = vand.u32 %v1591, 4294901760
    %1593 = vmatpush1.msra.mxu0 %v1592
    %v1594 = vand.u32 %v577, 4294901760
    %v1595 = vsub.f32 %v577, %v1594
    %v1596 = vand.u32 %v1595, 4294901760
    %1597 = vmatprep.subr.mxu0 %v1596
    %v1598 = vand.u32 %v576, 4294901760
    %v1599 = vsub.f32 %v576, %v1598
    %v1600 = vand.u32 %v1599, 4294901760
    %1601 = vmatpush1.msra.mxu0 %v1600
    %v1602 = vand.u32 %v579, 4294901760
    %v1603 = vsub.f32 %v579, %v1602
    %v1604 = vand.u32 %v1603, 4294901760
    %1605 = vmatprep.subr.mxu0 %v1604
    %v1606 = vand.u32 %v578, 4294901760
    %v1607 = vsub.f32 %v578, %v1606
    %v1608 = vand.u32 %v1607, 4294901760
    %1609 = vmatpush1.msra.mxu0 %v1608
    %v1610 = vand.u32 %v581, 4294901760
    %v1611 = vsub.f32 %v581, %v1610
    %v1612 = vand.u32 %v1611, 4294901760
    %1613 = vmatprep.subr.mxu0 %v1612
    %v1614 = vand.u32 %v580, 4294901760
    %v1615 = vsub.f32 %v580, %v1614
    %v1616 = vand.u32 %v1615, 4294901760
    %1617 = vmatpush1.msra.mxu0 %v1616
    %v1618 = vand.u32 %v583, 4294901760
    %v1619 = vsub.f32 %v583, %v1618
    %v1620 = vand.u32 %v1619, 4294901760
    %1621 = vmatprep.subr.mxu0 %v1620
    %v1622 = vand.u32 %v582, 4294901760
    %v1623 = vsub.f32 %v582, %v1622
    %v1624 = vand.u32 %v1623, 4294901760
    %1625 = vmatpush1.msra.mxu0 %v1624
    %v1626 = vand.u32 %v585, 4294901760
    %v1627 = vsub.f32 %v585, %v1626
    %v1628 = vand.u32 %v1627, 4294901760
    %1629 = vmatprep.subr.mxu0 %v1628
    %v1630 = vand.u32 %v584, 4294901760
    %v1631 = vsub.f32 %v584, %v1630
    %v1632 = vand.u32 %v1631, 4294901760
    %1633 = vmatpush1.msra.mxu0 %v1632
    %v1634 = vand.u32 %v587, 4294901760
    %v1635 = vsub.f32 %v587, %v1634
    %v1636 = vand.u32 %v1635, 4294901760
    %1637 = vmatprep.subr.mxu0 %v1636
    %v1638 = vand.u32 %v586, 4294901760
    %v1639 = vsub.f32 %v586, %v1638
    %v1640 = vand.u32 %v1639, 4294901760
    %1641 = vmatpush1.msra.mxu0 %v1640
    %v1642 = vand.u32 %v589, 4294901760
    %v1643 = vsub.f32 %v589, %v1642
    %v1644 = vand.u32 %v1643, 4294901760
    %1645 = vmatprep.subr.mxu0 %v1644
    %v1646 = vand.u32 %v588, 4294901760
    %v1647 = vsub.f32 %v588, %v1646
    %v1648 = vand.u32 %v1647, 4294901760
    %1649 = vmatpush1.msra.mxu0 %v1648
    %v1650 = vand.u32 %v591, 4294901760
    %v1651 = vsub.f32 %v591, %v1650
    %v1652 = vand.u32 %v1651, 4294901760
    %1653 = vmatprep.subr.mxu0 %v1652
    %v1654 = vand.u32 %v590, 4294901760
    %v1655 = vsub.f32 %v590, %v1654
    %v1656 = vand.u32 %v1655, 4294901760
    %1657 = vmatpush1.msra.mxu0 %v1656
    %v1658 = vand.u32 %v593, 4294901760
    %v1659 = vsub.f32 %v593, %v1658
    %v1660 = vand.u32 %v1659, 4294901760
    %1661 = vmatprep.subr.mxu0 %v1660
    %v1662 = vand.u32 %v592, 4294901760
    %v1663 = vsub.f32 %v592, %v1662
    %v1664 = vand.u32 %v1663, 4294901760
    %1665 = vmatpush1.msra.mxu0 %v1664
    %v1666 = vand.u32 %v595, 4294901760
    %v1667 = vsub.f32 %v595, %v1666
    %v1668 = vand.u32 %v1667, 4294901760
    %1669 = vmatprep.subr.mxu0 %v1668
    %v1670 = vand.u32 %v594, 4294901760
    %v1671 = vsub.f32 %v594, %v1670
    %v1672 = vand.u32 %v1671, 4294901760
    %1673 = vmatpush1.msra.mxu0 %v1672
    %v1674 = vand.u32 %v597, 4294901760
    %v1675 = vsub.f32 %v597, %v1674
    %v1676 = vand.u32 %v1675, 4294901760
    %1677 = vmatprep.subr.mxu0 %v1676
    %v1678 = vand.u32 %v596, 4294901760
    %v1679 = vsub.f32 %v596, %v1678
    %v1680 = vand.u32 %v1679, 4294901760
    %1681 = vmatpush1.msra.mxu0 %v1680
    %v1682 = vand.u32 %v599, 4294901760
    %v1683 = vsub.f32 %v599, %v1682
    %v1684 = vand.u32 %v1683, 4294901760
    %1685 = vmatprep.subr.mxu0 %v1684
    %v1686 = vand.u32 %v598, 4294901760
    %v1687 = vsub.f32 %v598, %v1686
    %v1688 = vand.u32 %v1687, 4294901760
    %1689 = vmatpush1.msra.mxu0 %v1688
    %v1690 = vand.u32 %v601, 4294901760
    %v1691 = vsub.f32 %v601, %v1690
    %v1692 = vand.u32 %v1691, 4294901760
    %1693 = vmatprep.subr.mxu0 %v1692
    %v1694 = vand.u32 %v600, 4294901760
    %v1695 = vsub.f32 %v600, %v1694
    %v1696 = vand.u32 %v1695, 4294901760
    %1697 = vmatpush1.msra.mxu0 %v1696
    %v1698 = vand.u32 %v603, 4294901760
    %v1699 = vsub.f32 %v603, %v1698
    %v1700 = vand.u32 %v1699, 4294901760
    %1701 = vmatprep.subr.mxu0 %v1700
    %v1702 = vand.u32 %v602, 4294901760
    %v1703 = vsub.f32 %v602, %v1702
    %v1704 = vand.u32 %v1703, 4294901760
    %1705 = vmatpush1.msra.mxu0 %v1704
    %v1706 = vand.u32 %v605, 4294901760
    %v1707 = vsub.f32 %v605, %v1706
    %v1708 = vand.u32 %v1707, 4294901760
    %1709 = vmatprep.subr.mxu0 %v1708
    %v1710 = vand.u32 %v604, 4294901760
    %v1711 = vsub.f32 %v604, %v1710
    %v1712 = vand.u32 %v1711, 4294901760
    %1713 = vmatpush1.msra.mxu0 %v1712
    %v1714 = vand.u32 %v607, 4294901760
    %v1715 = vsub.f32 %v607, %v1714
    %v1716 = vand.u32 %v1715, 4294901760
    %1717 = vmatprep.subr.mxu0 %v1716
    %v1718 = vand.u32 %v606, 4294901760
    %v1719 = vsub.f32 %v606, %v1718
    %v1720 = vand.u32 %v1719, 4294901760
    %1721 = vmatpush1.msra.mxu0 %v1720
    %v1722 = vand.u32 %v609, 4294901760
    %v1723 = vsub.f32 %v609, %v1722
    %v1724 = vand.u32 %v1723, 4294901760
    %1725 = vmatprep.subr.mxu0 %v1724
    %v1726 = vand.u32 %v608, 4294901760
    %v1727 = vsub.f32 %v608, %v1726
    %v1728 = vand.u32 %v1727, 4294901760
    %1729 = vmatpush1.msra.mxu0 %v1728
    %v1730 = vand.u32 %v611, 4294901760
    %v1731 = vsub.f32 %v611, %v1730
    %v1732 = vand.u32 %v1731, 4294901760
    %1733 = vmatprep.subr.mxu0 %v1732
    %v1734 = vand.u32 %v610, 4294901760
    %v1735 = vsub.f32 %v610, %v1734
    %v1736 = vand.u32 %v1735, 4294901760
    %1737 = vmatpush1.msra.mxu0 %v1736
    %v1738 = vand.u32 %v613, 4294901760
    %v1739 = vsub.f32 %v613, %v1738
    %v1740 = vand.u32 %v1739, 4294901760
    %1741 = vmatprep.subr.mxu0 %v1740
    %v1742 = vand.u32 %v612, 4294901760
    %v1743 = vsub.f32 %v612, %v1742
    %v1744 = vand.u32 %v1743, 4294901760
    %1745 = vmatpush1.msra.mxu0 %v1744
    %v1746 = vand.u32 %v615, 4294901760
    %v1747 = vsub.f32 %v615, %v1746
    %v1748 = vand.u32 %v1747, 4294901760
    %1749 = vmatprep.subr.mxu0 %v1748
    %v1750 = vand.u32 %v614, 4294901760
    %v1751 = vsub.f32 %v614, %v1750
    %v1752 = vand.u32 %v1751, 4294901760
    %1753 = vmatpush1.msra.mxu0 %v1752
    %v1754 = vand.u32 %v617, 4294901760
    %v1755 = vsub.f32 %v617, %v1754
    %v1756 = vand.u32 %v1755, 4294901760
    %1757 = vmatprep.subr.mxu0 %v1756
    %v1758 = vand.u32 %v616, 4294901760
    %v1759 = vsub.f32 %v616, %v1758
    %v1760 = vand.u32 %v1759, 4294901760
    %1761 = vmatpush1.msra.mxu0 %v1760
    %v1762 = vand.u32 %v619, 4294901760
    %v1763 = vsub.f32 %v619, %v1762
    %v1764 = vand.u32 %v1763, 4294901760
    %1765 = vmatprep.subr.mxu0 %v1764
    %v1766 = vand.u32 %v618, 4294901760
    %v1767 = vsub.f32 %v618, %v1766
    %v1768 = vand.u32 %v1767, 4294901760
    %1769 = vmatpush1.msra.mxu0 %v1768
    %v1770 = vand.u32 %v555, 4294901760
    %1771 = vmatprep.mubr.f32.mxu0 %v1770
    %v1772 = vand.u32 %v554, 4294901760
    %1773 = vmatmul.mubr.f32.gmra.mrb[0].mxu0 %v1772
    %v1774 = vpop.f32.mrb[0].mxu0
    %v1775 = vadd.f32 %v1510, %v1774
    %v1776 = vpop.f32.mrb[0].mxu0
    %v1777 = vadd.f32 %v1512, %v1776
    %1778 = vdwg.mxu0
    %v1779 = vand.u32 %v557, 4294901760
    %1780 = vmatprep.subr.mxu0 %v1779
    %v1781 = vand.u32 %v556, 4294901760
    %1782 = vmatpush1.msra.mxu0 %v1781
    %v1783 = vand.u32 %v559, 4294901760
    %1784 = vmatprep.subr.mxu0 %v1783
    %v1785 = vand.u32 %v558, 4294901760
    %1786 = vmatpush1.msra.mxu0 %v1785
    %v1787 = vand.u32 %v561, 4294901760
    %1788 = vmatprep.subr.mxu0 %v1787
    %v1789 = vand.u32 %v560, 4294901760
    %1790 = vmatpush1.msra.mxu0 %v1789
    %v1791 = vand.u32 %v563, 4294901760
    %1792 = vmatprep.subr.mxu0 %v1791
    %v1793 = vand.u32 %v562, 4294901760
    %1794 = vmatpush1.msra.mxu0 %v1793
    %v1795 = vand.u32 %v565, 4294901760
    %1796 = vmatprep.subr.mxu0 %v1795
    %v1797 = vand.u32 %v564, 4294901760
    %1798 = vmatpush1.msra.mxu0 %v1797
    %v1799 = vand.u32 %v567, 4294901760
    %1800 = vmatprep.subr.mxu0 %v1799
    %v1801 = vand.u32 %v566, 4294901760
    %1802 = vmatpush1.msra.mxu0 %v1801
    %v1803 = vand.u32 %v569, 4294901760
    %1804 = vmatprep.subr.mxu0 %v1803
    %v1805 = vand.u32 %v568, 4294901760
    %1806 = vmatpush1.msra.mxu0 %v1805
    %v1807 = vand.u32 %v571, 4294901760
    %1808 = vmatprep.subr.mxu0 %v1807
    %v1809 = vand.u32 %v570, 4294901760
    %1810 = vmatpush1.msra.mxu0 %v1809
    %v1811 = vand.u32 %v573, 4294901760
    %1812 = vmatprep.subr.mxu0 %v1811
    %v1813 = vand.u32 %v572, 4294901760
    %1814 = vmatpush1.msra.mxu0 %v1813
    %v1815 = vand.u32 %v575, 4294901760
    %1816 = vmatprep.subr.mxu0 %v1815
    %v1817 = vand.u32 %v574, 4294901760
    %1818 = vmatpush1.msra.mxu0 %v1817
    %v1819 = vand.u32 %v577, 4294901760
    %1820 = vmatprep.subr.mxu0 %v1819
    %v1821 = vand.u32 %v576, 4294901760
    %1822 = vmatpush1.msra.mxu0 %v1821
    %v1823 = vand.u32 %v579, 4294901760
    %1824 = vmatprep.subr.mxu0 %v1823
    %v1825 = vand.u32 %v578, 4294901760
    %1826 = vmatpush1.msra.mxu0 %v1825
    %v1827 = vand.u32 %v581, 4294901760
    %1828 = vmatprep.subr.mxu0 %v1827
    %v1829 = vand.u32 %v580, 4294901760
    %1830 = vmatpush1.msra.mxu0 %v1829
    %v1831 = vand.u32 %v583, 4294901760
    %1832 = vmatprep.subr.mxu0 %v1831
    %v1833 = vand.u32 %v582, 4294901760
    %1834 = vmatpush1.msra.mxu0 %v1833
    %v1835 = vand.u32 %v585, 4294901760
    %1836 = vmatprep.subr.mxu0 %v1835
    %v1837 = vand.u32 %v584, 4294901760
    %1838 = vmatpush1.msra.mxu0 %v1837
    %v1839 = vand.u32 %v587, 4294901760
    %1840 = vmatprep.subr.mxu0 %v1839
    %v1841 = vand.u32 %v586, 4294901760
    %1842 = vmatpush1.msra.mxu0 %v1841
    %v1843 = vand.u32 %v589, 4294901760
    %1844 = vmatprep.subr.mxu0 %v1843
    %v1845 = vand.u32 %v588, 4294901760
    %1846 = vmatpush1.msra.mxu0 %v1845
    %v1847 = vand.u32 %v591, 4294901760
    %1848 = vmatprep.subr.mxu0 %v1847
    %v1849 = vand.u32 %v590, 4294901760
    %1850 = vmatpush1.msra.mxu0 %v1849
    %v1851 = vand.u32 %v593, 4294901760
    %1852 = vmatprep.subr.mxu0 %v1851
    %v1853 = vand.u32 %v592, 4294901760
    %1854 = vmatpush1.msra.mxu0 %v1853
    %v1855 = vand.u32 %v595, 4294901760
    %1856 = vmatprep.subr.mxu0 %v1855
    %v1857 = vand.u32 %v594, 4294901760
    %1858 = vmatpush1.msra.mxu0 %v1857
    %v1859 = vand.u32 %v597, 4294901760
    %1860 = vmatprep.subr.mxu0 %v1859
    %v1861 = vand.u32 %v596, 4294901760
    %1862 = vmatpush1.msra.mxu0 %v1861
    %v1863 = vand.u32 %v599, 4294901760
    %1864 = vmatprep.subr.mxu0 %v1863
    %v1865 = vand.u32 %v598, 4294901760
    %1866 = vmatpush1.msra.mxu0 %v1865
    %v1867 = vand.u32 %v601, 4294901760
    %1868 = vmatprep.subr.mxu0 %v1867
    %v1869 = vand.u32 %v600, 4294901760
    %1870 = vmatpush1.msra.mxu0 %v1869
    %v1871 = vand.u32 %v603, 4294901760
    %1872 = vmatprep.subr.mxu0 %v1871
    %v1873 = vand.u32 %v602, 4294901760
    %1874 = vmatpush1.msra.mxu0 %v1873
    %v1875 = vand.u32 %v605, 4294901760
    %1876 = vmatprep.subr.mxu0 %v1875
    %v1877 = vand.u32 %v604, 4294901760
    %1878 = vmatpush1.msra.mxu0 %v1877
    %v1879 = vand.u32 %v607, 4294901760
    %1880 = vmatprep.subr.mxu0 %v1879
    %v1881 = vand.u32 %v606, 4294901760
    %1882 = vmatpush1.msra.mxu0 %v1881
    %v1883 = vand.u32 %v609, 4294901760
    %1884 = vmatprep.subr.mxu0 %v1883
    %v1885 = vand.u32 %v608, 4294901760
    %1886 = vmatpush1.msra.mxu0 %v1885
    %v1887 = vand.u32 %v611, 4294901760
    %1888 = vmatprep.subr.mxu0 %v1887
    %v1889 = vand.u32 %v610, 4294901760
    %1890 = vmatpush1.msra.mxu0 %v1889
    %v1891 = vand.u32 %v613, 4294901760
    %1892 = vmatprep.subr.mxu0 %v1891
    %v1893 = vand.u32 %v612, 4294901760
    %1894 = vmatpush1.msra.mxu0 %v1893
    %v1895 = vand.u32 %v615, 4294901760
    %1896 = vmatprep.subr.mxu0 %v1895
    %v1897 = vand.u32 %v614, 4294901760
    %1898 = vmatpush1.msra.mxu0 %v1897
    %v1899 = vand.u32 %v617, 4294901760
    %1900 = vmatprep.subr.mxu0 %v1899
    %v1901 = vand.u32 %v616, 4294901760
    %1902 = vmatpush1.msra.mxu0 %v1901
    %v1903 = vand.u32 %v619, 4294901760
    %1904 = vmatprep.subr.mxu0 %v1903
    %v1905 = vand.u32 %v618, 4294901760
    %1906 = vmatpush1.msra.mxu0 %v1905
    %v1907 = vand.u32 %v555, 4294901760
    %1908 = vmatprep.mubr.f32.mxu0 %v1907
    %v1909 = vand.u32 %v554, 4294901760
    %1910 = vmatmul.mubr.f32.gmra.mrb[0].mxu0 %v1909
    %v1911 = vpop.f32.mrb[0].mxu0
    %v1912 = vadd.f32 %v1775, %v1911
    %v1913 = vpop.f32.mrb[0].mxu0
    %v1914 = vadd.f32 %v1777, %v1913
    %1915 = vdwg.mxu0
    %v1916 = vmul.f32 %v1912, 0.01
    %v1917 = vmul.f32 %v1914, 0.01
    %v1918 = vmax.f32 %v1912, %v1916
    %v1919 = vmax.f32 %v1914, %v1917
    %v1920 = vld [vmem:[%s5] sm:$0xff]
    %v1921 = vld [vmem:[%s5 + $0x8] sm:$0xff]
    %v1922 = vld [vmem:[%s5 + $0x10] sm:$0xff]
    %v1923 = vld [vmem:[%s5 + $0x18] sm:$0xff]
    %v1924 = vld [vmem:[%s5 + $0x20] sm:$0xff]
    %v1925 = vld [vmem:[%s5 + $0x28] sm:$0xff]
    %v1926 = vld [vmem:[%s5 + $0x30] sm:$0xff]
    %v1927 = vld [vmem:[%s5 + $0x38] sm:$0xff]
    %v1928 = vld [vmem:[%s5 + $0x40] sm:$0xff]
    %v1929 = vld [vmem:[%s5 + $0x48] sm:$0xff]
    %v1930 = vld [vmem:[%s5 + $0x50] sm:$0xff]
    %v1931 = vld [vmem:[%s5 + $0x58] sm:$0xff]
    %v1932 = vld [vmem:[%s5 + $0x60] sm:$0xff]
    %v1933 = vld [vmem:[%s5 + $0x68] sm:$0xff]
    %v1934 = vld [vmem:[%s5 + $0x70] sm:$0xff]
    %v1935 = vld [vmem:[%s5 + $0x78] sm:$0xff]
    %v1936 = vld [vmem:[%s5 + $0x80] sm:$0xff]
    %v1937 = vld [vmem:[%s5 + $0x88] sm:$0xff]
    %v1938 = vld [vmem:[%s5 + $0x90] sm:$0xff]
    %v1939 = vld [vmem:[%s5 + $0x98] sm:$0xff]
    %v1940 = vld [vmem:[%s5 + $0xa0] sm:$0xff]
    %v1941 = vld [vmem:[%s5 + $0xa8] sm:$0xff]
    %v1942 = vld [vmem:[%s5 + $0xb0] sm:$0xff]
    %v1943 = vld [vmem:[%s5 + $0xb8] sm:$0xff]
    %v1944 = vld [vmem:[%s5 + $0xc0] sm:$0xff]
    %v1945 = vld [vmem:[%s5 + $0xc8] sm:$0xff]
    %v1946 = vld [vmem:[%s5 + $0xd0] sm:$0xff]
    %v1947 = vld [vmem:[%s5 + $0xd8] sm:$0xff]
    %v1948 = vld [vmem:[%s5 + $0xe0] sm:$0xff]
    %v1949 = vld [vmem:[%s5 + $0xe8] sm:$0xff]
    %v1950 = vld [vmem:[%s5 + $0xf0] sm:$0xff]
    %v1951 = vld [vmem:[%s5 + $0xf8] sm:$0xff]
    %v1952 = vld [vmem:[%s6] sm:$0x1]
    %v1954 = vlaneseq
    %v1955 = vshrl.u32 %v1954, 7
    %v1956 = vsub.s32 0, %v1955
    %v1957 = vrot.slane %v1952, %v1956
    %1959 = vmatprep.subr.mxu0 0.0
    %v1960 = vand.u32 %v1920, 4294901760
    %1961 = vmatpush1.msra.mxu0 %v1960
    %1962 = vmatprep.subr.mxu0 0.0
    %v1963 = vand.u32 %v1921, 4294901760
    %1964 = vmatpush1.msra.mxu0 %v1963
    %1965 = vmatprep.subr.mxu0 0.0
    %v1966 = vand.u32 %v1922, 4294901760
    %1967 = vmatpush1.msra.mxu0 %v1966
    %1968 = vmatprep.subr.mxu0 0.0
    %v1969 = vand.u32 %v1923, 4294901760
    %1970 = vmatpush1.msra.mxu0 %v1969
    %1971 = vmatprep.subr.mxu0 0.0
    %v1972 = vand.u32 %v1924, 4294901760
    %1973 = vmatpush1.msra.mxu0 %v1972
    %1974 = vmatprep.subr.mxu0 0.0
    %v1975 = vand.u32 %v1925, 4294901760
    %1976 = vmatpush1.msra.mxu0 %v1975
    %1977 = vmatprep.subr.mxu0 0.0
    %v1978 = vand.u32 %v1926, 4294901760
    %1979 = vmatpush1.msra.mxu0 %v1978
    %1980 = vmatprep.subr.mxu0 0.0
    %v1981 = vand.u32 %v1927, 4294901760
    %1982 = vmatpush1.msra.mxu0 %v1981
    %1983 = vmatprep.subr.mxu0 0.0
    %v1984 = vand.u32 %v1928, 4294901760
    %1985 = vmatpush1.msra.mxu0 %v1984
    %1986 = vmatprep.subr.mxu0 0.0
    %v1987 = vand.u32 %v1929, 4294901760
    %1988 = vmatpush1.msra.mxu0 %v1987
    %1989 = vmatprep.subr.mxu0 0.0
    %v1990 = vand.u32 %v1930, 4294901760
    %1991 = vmatpush1.msra.mxu0 %v1990
    %1992 = vmatprep.subr.mxu0 0.0
    %v1993 = vand.u32 %v1931, 4294901760
    %1994 = vmatpush1.msra.mxu0 %v1993
    %1995 = vmatprep.subr.mxu0 0.0
    %v1996 = vand.u32 %v1932, 4294901760
    %1997 = vmatpush1.msra.mxu0 %v1996
    %1998 = vmatprep.subr.mxu0 0.0
    %v1999 = vand.u32 %v1933, 4294901760
    %2000 = vmatpush1.msra.mxu0 %v1999
    %2001 = vmatprep.subr.mxu0 0.0
    %v2002 = vand.u32 %v1934, 4294901760
    %2003 = vmatpush1.msra.mxu0 %v2002
    %2004 = vmatprep.subr.mxu0 0.0
    %v2005 = vand.u32 %v1935, 4294901760
    %2006 = vmatpush1.msra.mxu0 %v2005
    %2007 = vmatprep.subr.mxu0 0.0
    %v2008 = vand.u32 %v1936, 4294901760
    %2009 = vmatpush1.msra.mxu0 %v2008
    %2010 = vmatprep.subr.mxu0 0.0
    %v2011 = vand.u32 %v1937, 4294901760
    %2012 = vmatpush1.msra.mxu0 %v2011
    %2013 = vmatprep.subr.mxu0 0.0
    %v2014 = vand.u32 %v1938, 4294901760
    %2015 = vmatpush1.msra.mxu0 %v2014
    %2016 = vmatprep.subr.mxu0 0.0
    %v2017 = vand.u32 %v1939, 4294901760
    %2018 = vmatpush1.msra.mxu0 %v2017
    %2019 = vmatprep.subr.mxu0 0.0
    %v2020 = vand.u32 %v1940, 4294901760
    %2021 = vmatpush1.msra.mxu0 %v2020
    %2022 = vmatprep.subr.mxu0 0.0
    %v2023 = vand.u32 %v1941, 4294901760
    %2024 = vmatpush1.msra.mxu0 %v2023
    %2025 = vmatprep.subr.mxu0 0.0
    %v2026 = vand.u32 %v1942, 4294901760
    %2027 = vmatpush1.msra.mxu0 %v2026
    %2028 = vmatprep.subr.mxu0 0.0
    %v2029 = vand.u32 %v1943, 4294901760
    %2030 = vmatpush1.msra.mxu0 %v2029
    %2031 = vmatprep.subr.mxu0 0.0
    %v2032 = vand.u32 %v1944, 4294901760
    %2033 = vmatpush1.msra.mxu0 %v2032
    %2034 = vmatprep.subr.mxu0 0.0
    %v2035 = vand.u32 %v1945, 4294901760
    %2036 = vmatpush1.msra.mxu0 %v2035
    %2037 = vmatprep.subr.mxu0 0.0
    %v2038 = vand.u32 %v1946, 4294901760
    %2039 = vmatpush1.msra.mxu0 %v2038
    %2040 = vmatprep.subr.mxu0 0.0
    %v2041 = vand.u32 %v1947, 4294901760
    %2042 = vmatpush1.msra.mxu0 %v2041
    %2043 = vmatprep.subr.mxu0 0.0
    %v2044 = vand.u32 %v1948, 4294901760
    %2045 = vmatpush1.msra.mxu0 %v2044
    %2046 = vmatprep.subr.mxu0 0.0
    %v2047 = vand.u32 %v1949, 4294901760
    %2048 = vmatpush1.msra.mxu0 %v2047
    %2049 = vmatprep.subr.mxu0 0.0
    %v2050 = vand.u32 %v1950, 4294901760
    %2051 = vmatpush1.msra.mxu0 %v2050
    %2052 = vmatprep.subr.mxu0 0.0
    %v2053 = vand.u32 %v1951, 4294901760
    %2054 = vmatpush1.msra.mxu0 %v2053
    %v2055 = vand.u32 %v1919, 4294901760
    %v2056 = vsub.f32 %v1919, %v2055
    %v2057 = vand.u32 %v2056, 4294901760
    %v2058 = vsub.f32 %v2056, %v2057
    %v2059 = vand.u32 %v2058, 4294901760
    %2060 = vmatprep.mubr.f32.mxu0 %v2059
    %v2061 = vand.u32 %v1918, 4294901760
    %v2062 = vsub.f32 %v1918, %v2061
    %v2063 = vand.u32 %v2062, 4294901760
    %v2064 = vsub.f32 %v2062, %v2063
    %v2065 = vand.u32 %v2064, 4294901760
    %2066 = vmatmul.mubr.f32.gmra.mrb[0].mxu0 %v2065
    %v2067 = vpop.f32.mrb[0].mxu0
    %v2068 = vadd.f32 %v1957, %v2067
    %v2069 = vpop.f32.mrb[0].mxu0
    %2070 = vdwg.mxu0
    %2071 = vmatprep.subr.mxu0 0.0
    %v2072 = vand.u32 %v1920, 4294901760
    %v2073 = vsub.f32 %v1920, %v2072
    %v2074 = vand.u32 %v2073, 4294901760
    %v2075 = vsub.f32 %v2073, %v2074
    %v2076 = vand.u32 %v2075, 4294901760
    %2077 = vmatpush1.msra.mxu0 %v2076
    %2078 = vmatprep.subr.mxu0 0.0
    %v2079 = vand.u32 %v1921, 4294901760
    %v2080 = vsub.f32 %v1921, %v2079
    %v2081 = vand.u32 %v2080, 4294901760
    %v2082 = vsub.f32 %v2080, %v2081
    %v2083 = vand.u32 %v2082, 4294901760
    %2084 = vmatpush1.msra.mxu0 %v2083
    %2085 = vmatprep.subr.mxu0 0.0
    %v2086 = vand.u32 %v1922, 4294901760
    %v2087 = vsub.f32 %v1922, %v2086
    %v2088 = vand.u32 %v2087, 4294901760
    %v2089 = vsub.f32 %v2087, %v2088
    %v2090 = vand.u32 %v2089, 4294901760
    %2091 = vmatpush1.msra.mxu0 %v2090
    %2092 = vmatprep.subr.mxu0 0.0
    %v2093 = vand.u32 %v1923, 4294901760
    %v2094 = vsub.f32 %v1923, %v2093
    %v2095 = vand.u32 %v2094, 4294901760
    %v2096 = vsub.f32 %v2094, %v2095
    %v2097 = vand.u32 %v2096, 4294901760
    %2098 = vmatpush1.msra.mxu0 %v2097
    %2099 = vmatprep.subr.mxu0 0.0
    %v2100 = vand.u32 %v1924, 4294901760
    %v2101 = vsub.f32 %v1924, %v2100
    %v2102 = vand.u32 %v2101, 4294901760
    %v2103 = vsub.f32 %v2101, %v2102
    %v2104 = vand.u32 %v2103, 4294901760
    %2105 = vmatpush1.msra.mxu0 %v2104
    %2106 = vmatprep.subr.mxu0 0.0
    %v2107 = vand.u32 %v1925, 4294901760
    %v2108 = vsub.f32 %v1925, %v2107
    %v2109 = vand.u32 %v2108, 4294901760
    %v2110 = vsub.f32 %v2108, %v2109
    %v2111 = vand.u32 %v2110, 4294901760
    %2112 = vmatpush1.msra.mxu0 %v2111
    %2113 = vmatprep.subr.mxu0 0.0
    %v2114 = vand.u32 %v1926, 4294901760
    %v2115 = vsub.f32 %v1926, %v2114
    %v2116 = vand.u32 %v2115, 4294901760
    %v2117 = vsub.f32 %v2115, %v2116
    %v2118 = vand.u32 %v2117, 4294901760
    %2119 = vmatpush1.msra.mxu0 %v2118
    %2120 = vmatprep.subr.mxu0 0.0
    %v2121 = vand.u32 %v1927, 4294901760
    %v2122 = vsub.f32 %v1927, %v2121
    %v2123 = vand.u32 %v2122, 4294901760
    %v2124 = vsub.f32 %v2122, %v2123
    %v2125 = vand.u32 %v2124, 4294901760
    %2126 = vmatpush1.msra.mxu0 %v2125
    %2127 = vmatprep.subr.mxu0 0.0
    %v2128 = vand.u32 %v1928, 4294901760
    %v2129 = vsub.f32 %v1928, %v2128
    %v2130 = vand.u32 %v2129, 4294901760
    %v2131 = vsub.f32 %v2129, %v2130
    %v2132 = vand.u32 %v2131, 4294901760
    %2133 = vmatpush1.msra.mxu0 %v2132
    %2134 = vmatprep.subr.mxu0 0.0
    %v2135 = vand.u32 %v1929, 4294901760
    %v2136 = vsub.f32 %v1929, %v2135
    %v2137 = vand.u32 %v2136, 4294901760
    %v2138 = vsub.f32 %v2136, %v2137
    %v2139 = vand.u32 %v2138, 4294901760
    %2140 = vmatpush1.msra.mxu0 %v2139
    %2141 = vmatprep.subr.mxu0 0.0
    %v2142 = vand.u32 %v1930, 4294901760
    %v2143 = vsub.f32 %v1930, %v2142
    %v2144 = vand.u32 %v2143, 4294901760
    %v2145 = vsub.f32 %v2143, %v2144
    %v2146 = vand.u32 %v2145, 4294901760
    %2147 = vmatpush1.msra.mxu0 %v2146
    %2148 = vmatprep.subr.mxu0 0.0
    %v2149 = vand.u32 %v1931, 4294901760
    %v2150 = vsub.f32 %v1931, %v2149
    %v2151 = vand.u32 %v2150, 4294901760
    %v2152 = vsub.f32 %v2150, %v2151
    %v2153 = vand.u32 %v2152, 4294901760
    %2154 = vmatpush1.msra.mxu0 %v2153
    %2155 = vmatprep.subr.mxu0 0.0
    %v2156 = vand.u32 %v1932, 4294901760
    %v2157 = vsub.f32 %v1932, %v2156
    %v2158 = vand.u32 %v2157, 4294901760
    %v2159 = vsub.f32 %v2157, %v2158
    %v2160 = vand.u32 %v2159, 4294901760
    %2161 = vmatpush1.msra.mxu0 %v2160
    %2162 = vmatprep.subr.mxu0 0.0
    %v2163 = vand.u32 %v1933, 4294901760
    %v2164 = vsub.f32 %v1933, %v2163
    %v2165 = vand.u32 %v2164, 4294901760
    %v2166 = vsub.f32 %v2164, %v2165
    %v2167 = vand.u32 %v2166, 4294901760
    %2168 = vmatpush1.msra.mxu0 %v2167
    %2169 = vmatprep.subr.mxu0 0.0
    %v2170 = vand.u32 %v1934, 4294901760
    %v2171 = vsub.f32 %v1934, %v2170
    %v2172 = vand.u32 %v2171, 4294901760
    %v2173 = vsub.f32 %v2171, %v2172
    %v2174 = vand.u32 %v2173, 4294901760
    %2175 = vmatpush1.msra.mxu0 %v2174
    %2176 = vmatprep.subr.mxu0 0.0
    %v2177 = vand.u32 %v1935, 4294901760
    %v2178 = vsub.f32 %v1935, %v2177
    %v2179 = vand.u32 %v2178, 4294901760
    %v2180 = vsub.f32 %v2178, %v2179
    %v2181 = vand.u32 %v2180, 4294901760
    %2182 = vmatpush1.msra.mxu0 %v2181
    %2183 = vmatprep.subr.mxu0 0.0
    %v2184 = vand.u32 %v1936, 4294901760
    %v2185 = vsub.f32 %v1936, %v2184
    %v2186 = vand.u32 %v2185, 4294901760
    %v2187 = vsub.f32 %v2185, %v2186
    %v2188 = vand.u32 %v2187, 4294901760
    %2189 = vmatpush1.msra.mxu0 %v2188
    %2190 = vmatprep.subr.mxu0 0.0
    %v2191 = vand.u32 %v1937, 4294901760
    %v2192 = vsub.f32 %v1937, %v2191
    %v2193 = vand.u32 %v2192, 4294901760
    %v2194 = vsub.f32 %v2192, %v2193
    %v2195 = vand.u32 %v2194, 4294901760
    %2196 = vmatpush1.msra.mxu0 %v2195
    %2197 = vmatprep.subr.mxu0 0.0
    %v2198 = vand.u32 %v1938, 4294901760
    %v2199 = vsub.f32 %v1938, %v2198
    %v2200 = vand.u32 %v2199, 4294901760
    %v2201 = vsub.f32 %v2199, %v2200
    %v2202 = vand.u32 %v2201, 4294901760
    %2203 = vmatpush1.msra.mxu0 %v2202
    %2204 = vmatprep.subr.mxu0 0.0
    %v2205 = vand.u32 %v1939, 4294901760
    %v2206 = vsub.f32 %v1939, %v2205
    %v2207 = vand.u32 %v2206, 4294901760
    %v2208 = vsub.f32 %v2206, %v2207
    %v2209 = vand.u32 %v2208, 4294901760
    %2210 = vmatpush1.msra.mxu0 %v2209
    %2211 = vmatprep.subr.mxu0 0.0
    %v2212 = vand.u32 %v1940, 4294901760
    %v2213 = vsub.f32 %v1940, %v2212
    %v2214 = vand.u32 %v2213, 4294901760
    %v2215 = vsub.f32 %v2213, %v2214
    %v2216 = vand.u32 %v2215, 4294901760
    %2217 = vmatpush1.msra.mxu0 %v2216
    %2218 = vmatprep.subr.mxu0 0.0
    %v2219 = vand.u32 %v1941, 4294901760
    %v2220 = vsub.f32 %v1941, %v2219
    %v2221 = vand.u32 %v2220, 4294901760
    %v2222 = vsub.f32 %v2220, %v2221
    %v2223 = vand.u32 %v2222, 4294901760
    %2224 = vmatpush1.msra.mxu0 %v2223
    %2225 = vmatprep.subr.mxu0 0.0
    %v2226 = vand.u32 %v1942, 4294901760
    %v2227 = vsub.f32 %v1942, %v2226
    %v2228 = vand.u32 %v2227, 4294901760
    %v2229 = vsub.f32 %v2227, %v2228
    %v2230 = vand.u32 %v2229, 4294901760
    %2231 = vmatpush1.msra.mxu0 %v2230
    %2232 = vmatprep.subr.mxu0 0.0
    %v2233 = vand.u32 %v1943, 4294901760
    %v2234 = vsub.f32 %v1943, %v2233
    %v2235 = vand.u32 %v2234, 4294901760
    %v2236 = vsub.f32 %v2234, %v2235
    %v2237 = vand.u32 %v2236, 4294901760
    %2238 = vmatpush1.msra.mxu0 %v2237
    %2239 = vmatprep.subr.mxu0 0.0
    %v2240 = vand.u32 %v1944, 4294901760
    %v2241 = vsub.f32 %v1944, %v2240
    %v2242 = vand.u32 %v2241, 4294901760
    %v2243 = vsub.f32 %v2241, %v2242
    %v2244 = vand.u32 %v2243, 4294901760
    %2245 = vmatpush1.msra.mxu0 %v2244
    %2246 = vmatprep.subr.mxu0 0.0
    %v2247 = vand.u32 %v1945, 4294901760
    %v2248 = vsub.f32 %v1945, %v2247
    %v2249 = vand.u32 %v2248, 4294901760
    %v2250 = vsub.f32 %v2248, %v2249
    %v2251 = vand.u32 %v2250, 4294901760
    %2252 = vmatpush1.msra.mxu0 %v2251
    %2253 = vmatprep.subr.mxu0 0.0
    %v2254 = vand.u32 %v1946, 4294901760
    %v2255 = vsub.f32 %v1946, %v2254
    %v2256 = vand.u32 %v2255, 4294901760
    %v2257 = vsub.f32 %v2255, %v2256
    %v2258 = vand.u32 %v2257, 4294901760
    %2259 = vmatpush1.msra.mxu0 %v2258
    %2260 = vmatprep.subr.mxu0 0.0
    %v2261 = vand.u32 %v1947, 4294901760
    %v2262 = vsub.f32 %v1947, %v2261
    %v2263 = vand.u32 %v2262, 4294901760
    %v2264 = vsub.f32 %v2262, %v2263
    %v2265 = vand.u32 %v2264, 4294901760
    %2266 = vmatpush1.msra.mxu0 %v2265
    %2267 = vmatprep.subr.mxu0 0.0
    %v2268 = vand.u32 %v1948, 4294901760
    %v2269 = vsub.f32 %v1948, %v2268
    %v2270 = vand.u32 %v2269, 4294901760
    %v2271 = vsub.f32 %v2269, %v2270
    %v2272 = vand.u32 %v2271, 4294901760
    %2273 = vmatpush1.msra.mxu0 %v2272
    %2274 = vmatprep.subr.mxu0 0.0
    %v2275 = vand.u32 %v1949, 4294901760
    %v2276 = vsub.f32 %v1949, %v2275
    %v2277 = vand.u32 %v2276, 4294901760
    %v2278 = vsub.f32 %v2276, %v2277
    %v2279 = vand.u32 %v2278, 4294901760
    %2280 = vmatpush1.msra.mxu0 %v2279
    %2281 = vmatprep.subr.mxu0 0.0
    %v2282 = vand.u32 %v1950, 4294901760
    %v2283 = vsub.f32 %v1950, %v2282
    %v2284 = vand.u32 %v2283, 4294901760
    %v2285 = vsub.f32 %v2283, %v2284
    %v2286 = vand.u32 %v2285, 4294901760
    %2287 = vmatpush1.msra.mxu0 %v2286
    %2288 = vmatprep.subr.mxu0 0.0
    %v2289 = vand.u32 %v1951, 4294901760
    %v2290 = vsub.f32 %v1951, %v2289
    %v2291 = vand.u32 %v2290, 4294901760
    %v2292 = vsub.f32 %v2290, %v2291
    %v2293 = vand.u32 %v2292, 4294901760
    %2294 = vmatpush1.msra.mxu0 %v2293
    %v2295 = vand.u32 %v1919, 4294901760
    %2296 = vmatprep.mubr.f32.mxu0 %v2295
    %v2297 = vand.u32 %v1918, 4294901760
    %2298 = vmatmul.mubr.f32.gmra.mrb[0].mxu0 %v2297
    %v2299 = vpop.f32.mrb[0].mxu0
    %v2300 = vadd.f32 %v2068, %v2299
    %v2301 = vpop.f32.mrb[0].mxu0
    %2302 = vdwg.mxu0
    %2303 = vmatprep.subr.mxu0 0.0
    %v2304 = vand.u32 %v1920, 4294901760
    %v2305 = vsub.f32 %v1920, %v2304
    %2306 = vmatpush1.msra.mxu0 %v2305
    %2307 = vmatprep.subr.mxu0 0.0
    %v2308 = vand.u32 %v1921, 4294901760
    %v2309 = vsub.f32 %v1921, %v2308
    %2310 = vmatpush1.msra.mxu0 %v2309
    %2311 = vmatprep.subr.mxu0 0.0
    %v2312 = vand.u32 %v1922, 4294901760
    %v2313 = vsub.f32 %v1922, %v2312
    %2314 = vmatpush1.msra.mxu0 %v2313
    %2315 = vmatprep.subr.mxu0 0.0
    %v2316 = vand.u32 %v1923, 4294901760
    %v2317 = vsub.f32 %v1923, %v2316
    %2318 = vmatpush1.msra.mxu0 %v2317
    %2319 = vmatprep.subr.mxu0 0.0
    %v2320 = vand.u32 %v1924, 4294901760
    %v2321 = vsub.f32 %v1924, %v2320
    %2322 = vmatpush1.msra.mxu0 %v2321
    %2323 = vmatprep.subr.mxu0 0.0
    %v2324 = vand.u32 %v1925, 4294901760
    %v2325 = vsub.f32 %v1925, %v2324
    %2326 = vmatpush1.msra.mxu0 %v2325
    %2327 = vmatprep.subr.mxu0 0.0
    %v2328 = vand.u32 %v1926, 4294901760
    %v2329 = vsub.f32 %v1926, %v2328
    %2330 = vmatpush1.msra.mxu0 %v2329
    %2331 = vmatprep.subr.mxu0 0.0
    %v2332 = vand.u32 %v1927, 4294901760
    %v2333 = vsub.f32 %v1927, %v2332
    %2334 = vmatpush1.msra.mxu0 %v2333
    %2335 = vmatprep.subr.mxu0 0.0
    %v2336 = vand.u32 %v1928, 4294901760
    %v2337 = vsub.f32 %v1928, %v2336
    %2338 = vmatpush1.msra.mxu0 %v2337
    %2339 = vmatprep.subr.mxu0 0.0
    %v2340 = vand.u32 %v1929, 4294901760
    %v2341 = vsub.f32 %v1929, %v2340
    %2342 = vmatpush1.msra.mxu0 %v2341
    %2343 = vmatprep.subr.mxu0 0.0
    %v2344 = vand.u32 %v1930, 4294901760
    %v2345 = vsub.f32 %v1930, %v2344
    %2346 = vmatpush1.msra.mxu0 %v2345
    %2347 = vmatprep.subr.mxu0 0.0
    %v2348 = vand.u32 %v1931, 4294901760
    %v2349 = vsub.f32 %v1931, %v2348
    %2350 = vmatpush1.msra.mxu0 %v2349
    %2351 = vmatprep.subr.mxu0 0.0
    %v2352 = vand.u32 %v1932, 4294901760
    %v2353 = vsub.f32 %v1932, %v2352
    %2354 = vmatpush1.msra.mxu0 %v2353
    %2355 = vmatprep.subr.mxu0 0.0
    %v2356 = vand.u32 %v1933, 4294901760
    %v2357 = vsub.f32 %v1933, %v2356
    %2358 = vmatpush1.msra.mxu0 %v2357
    %2359 = vmatprep.subr.mxu0 0.0
    %v2360 = vand.u32 %v1934, 4294901760
    %v2361 = vsub.f32 %v1934, %v2360
    %2362 = vmatpush1.msra.mxu0 %v2361
    %2363 = vmatprep.subr.mxu0 0.0
    %v2364 = vand.u32 %v1935, 4294901760
    %v2365 = vsub.f32 %v1935, %v2364
    %2366 = vmatpush1.msra.mxu0 %v2365
    %2367 = vmatprep.subr.mxu0 0.0
    %v2368 = vand.u32 %v1936, 4294901760
    %v2369 = vsub.f32 %v1936, %v2368
    %2370 = vmatpush1.msra.mxu0 %v2369
    %2371 = vmatprep.subr.mxu0 0.0
    %v2372 = vand.u32 %v1937, 4294901760
    %v2373 = vsub.f32 %v1937, %v2372
    %2374 = vmatpush1.msra.mxu0 %v2373
    %2375 = vmatprep.subr.mxu0 0.0
    %v2376 = vand.u32 %v1938, 4294901760
    %v2377 = vsub.f32 %v1938, %v2376
    %2378 = vmatpush1.msra.mxu0 %v2377
    %2379 = vmatprep.subr.mxu0 0.0
    %v2380 = vand.u32 %v1939, 4294901760
    %v2381 = vsub.f32 %v1939, %v2380
    %2382 = vmatpush1.msra.mxu0 %v2381
    %2383 = vmatprep.subr.mxu0 0.0
    %v2384 = vand.u32 %v1940, 4294901760
    %v2385 = vsub.f32 %v1940, %v2384
    %2386 = vmatpush1.msra.mxu0 %v2385
    %2387 = vmatprep.subr.mxu0 0.0
    %v2388 = vand.u32 %v1941, 4294901760
    %v2389 = vsub.f32 %v1941, %v2388
    %2390 = vmatpush1.msra.mxu0 %v2389
    %2391 = vmatprep.subr.mxu0 0.0
    %v2392 = vand.u32 %v1942, 4294901760
    %v2393 = vsub.f32 %v1942, %v2392
    %2394 = vmatpush1.msra.mxu0 %v2393
    %2395 = vmatprep.subr.mxu0 0.0
    %v2396 = vand.u32 %v1943, 4294901760
    %v2397 = vsub.f32 %v1943, %v2396
    %2398 = vmatpush1.msra.mxu0 %v2397
    %2399 = vmatprep.subr.mxu0 0.0
    %v2400 = vand.u32 %v1944, 4294901760
    %v2401 = vsub.f32 %v1944, %v2400
    %2402 = vmatpush1.msra.mxu0 %v2401
    %2403 = vmatprep.subr.mxu0 0.0
    %v2404 = vand.u32 %v1945, 4294901760
    %v2405 = vsub.f32 %v1945, %v2404
    %2406 = vmatpush1.msra.mxu0 %v2405
    %2407 = vmatprep.subr.mxu0 0.0
    %v2408 = vand.u32 %v1946, 4294901760
    %v2409 = vsub.f32 %v1946, %v2408
    %2410 = vmatpush1.msra.mxu0 %v2409
    %2411 = vmatprep.subr.mxu0 0.0
    %v2412 = vand.u32 %v1947, 4294901760
    %v2413 = vsub.f32 %v1947, %v2412
    %2414 = vmatpush1.msra.mxu0 %v2413
    %2415 = vmatprep.subr.mxu0 0.0
    %v2416 = vand.u32 %v1948, 4294901760
    %v2417 = vsub.f32 %v1948, %v2416
    %2418 = vmatpush1.msra.mxu0 %v2417
    %2419 = vmatprep.subr.mxu0 0.0
    %v2420 = vand.u32 %v1949, 4294901760
    %v2421 = vsub.f32 %v1949, %v2420
    %2422 = vmatpush1.msra.mxu0 %v2421
    %2423 = vmatprep.subr.mxu0 0.0
    %v2424 = vand.u32 %v1950, 4294901760
    %v2425 = vsub.f32 %v1950, %v2424
    %2426 = vmatpush1.msra.mxu0 %v2425
    %2427 = vmatprep.subr.mxu0 0.0
    %v2428 = vand.u32 %v1951, 4294901760
    %v2429 = vsub.f32 %v1951, %v2428
    %2430 = vmatpush1.msra.mxu0 %v2429
    %v2431 = vand.u32 %v1919, 4294901760
    %v2432 = vsub.f32 %v1919, %v2431
    %2433 = vmatprep.mubr.f32.mxu0 %v2432
    %v2434 = vand.u32 %v1918, 4294901760
    %v2435 = vsub.f32 %v1918, %v2434
    %2436 = vmatmul.mubr.f32.gmra.mrb[0].mxu0 %v2435
    %v2437 = vpop.f32.mrb[0].mxu0
    %v2438 = vadd.f32 %v2300, %v2437
    %v2439 = vpop.f32.mrb[0].mxu0
    %2440 = vdwg.mxu0
    %2441 = vmatprep.subr.mxu0 0.0
    %v2442 = vand.u32 %v1920, 4294901760
    %2443 = vmatpush1.msra.mxu0 %v2442
    %2444 = vmatprep.subr.mxu0 0.0
    %v2445 = vand.u32 %v1921, 4294901760
    %2446 = vmatpush1.msra.mxu0 %v2445
    %2447 = vmatprep.subr.mxu0 0.0
    %v2448 = vand.u32 %v1922, 4294901760
    %2449 = vmatpush1.msra.mxu0 %v2448
    %2450 = vmatprep.subr.mxu0 0.0
    %v2451 = vand.u32 %v1923, 4294901760
    %2452 = vmatpush1.msra.mxu0 %v2451
    %2453 = vmatprep.subr.mxu0 0.0
    %v2454 = vand.u32 %v1924, 4294901760
    %2455 = vmatpush1.msra.mxu0 %v2454
    %2456 = vmatprep.subr.mxu0 0.0
    %v2457 = vand.u32 %v1925, 4294901760
    %2458 = vmatpush1.msra.mxu0 %v2457
    %2459 = vmatprep.subr.mxu0 0.0
    %v2460 = vand.u32 %v1926, 4294901760
    %2461 = vmatpush1.msra.mxu0 %v2460
    %2462 = vmatprep.subr.mxu0 0.0
    %v2463 = vand.u32 %v1927, 4294901760
    %2464 = vmatpush1.msra.mxu0 %v2463
    %2465 = vmatprep.subr.mxu0 0.0
    %v2466 = vand.u32 %v1928, 4294901760
    %2467 = vmatpush1.msra.mxu0 %v2466
    %2468 = vmatprep.subr.mxu0 0.0
    %v2469 = vand.u32 %v1929, 4294901760
    %2470 = vmatpush1.msra.mxu0 %v2469
    %2471 = vmatprep.subr.mxu0 0.0
    %v2472 = vand.u32 %v1930, 4294901760
    %2473 = vmatpush1.msra.mxu0 %v2472
    %2474 = vmatprep.subr.mxu0 0.0
    %v2475 = vand.u32 %v1931, 4294901760
    %2476 = vmatpush1.msra.mxu0 %v2475
    %2477 = vmatprep.subr.mxu0 0.0
    %v2478 = vand.u32 %v1932, 4294901760
    %2479 = vmatpush1.msra.mxu0 %v2478
    %2480 = vmatprep.subr.mxu0 0.0
    %v2481 = vand.u32 %v1933, 4294901760
    %2482 = vmatpush1.msra.mxu0 %v2481
    %2483 = vmatprep.subr.mxu0 0.0
    %v2484 = vand.u32 %v1934, 4294901760
    %2485 = vmatpush1.msra.mxu0 %v2484
    %2486 = vmatprep.subr.mxu0 0.0
    %v2487 = vand.u32 %v1935, 4294901760
    %2488 = vmatpush1.msra.mxu0 %v2487
    %2489 = vmatprep.subr.mxu0 0.0
    %v2490 = vand.u32 %v1936, 4294901760
    %2491 = vmatpush1.msra.mxu0 %v2490
    %2492 = vmatprep.subr.mxu0 0.0
    %v2493 = vand.u32 %v1937, 4294901760
    %2494 = vmatpush1.msra.mxu0 %v2493
    %2495 = vmatprep.subr.mxu0 0.0
    %v2496 = vand.u32 %v1938, 4294901760
    %2497 = vmatpush1.msra.mxu0 %v2496
    %2498 = vmatprep.subr.mxu0 0.0
    %v2499 = vand.u32 %v1939, 4294901760
    %2500 = vmatpush1.msra.mxu0 %v2499
    %2501 = vmatprep.subr.mxu0 0.0
    %v2502 = vand.u32 %v1940, 4294901760
    %2503 = vmatpush1.msra.mxu0 %v2502
    %2504 = vmatprep.subr.mxu0 0.0
    %v2505 = vand.u32 %v1941, 4294901760
    %2506 = vmatpush1.msra.mxu0 %v2505
    %2507 = vmatprep.subr.mxu0 0.0
    %v2508 = vand.u32 %v1942, 4294901760
    %2509 = vmatpush1.msra.mxu0 %v2508
    %2510 = vmatprep.subr.mxu0 0.0
    %v2511 = vand.u32 %v1943, 4294901760
    %2512 = vmatpush1.msra.mxu0 %v2511
    %2513 = vmatprep.subr.mxu0 0.0
    %v2514 = vand.u32 %v1944, 4294901760
    %2515 = vmatpush1.msra.mxu0 %v2514
    %2516 = vmatprep.subr.mxu0 0.0
    %v2517 = vand.u32 %v1945, 4294901760
    %2518 = vmatpush1.msra.mxu0 %v2517
    %2519 = vmatprep.subr.mxu0 0.0
    %v2520 = vand.u32 %v1946, 4294901760
    %2521 = vmatpush1.msra.mxu0 %v2520
    %2522 = vmatprep.subr.mxu0 0.0
    %v2523 = vand.u32 %v1947, 4294901760
    %2524 = vmatpush1.msra.mxu0 %v2523
    %2525 = vmatprep.subr.mxu0 0.0
    %v2526 = vand.u32 %v1948, 4294901760
    %2527 = vmatpush1.msra.mxu0 %v2526
    %2528 = vmatprep.subr.mxu0 0.0
    %v2529 = vand.u32 %v1949, 4294901760
    %2530 = vmatpush1.msra.mxu0 %v2529
    %2531 = vmatprep.subr.mxu0 0.0
    %v2532 = vand.u32 %v1950, 4294901760
    %2533 = vmatpush1.msra.mxu0 %v2532
    %2534 = vmatprep.subr.mxu0 0.0
    %v2535 = vand.u32 %v1951, 4294901760
    %2536 = vmatpush1.msra.mxu0 %v2535
    %v2537 = vand.u32 %v1919, 4294901760
    %v2538 = vsub.f32 %v1919, %v2537
    %v2539 = vand.u32 %v2538, 4294901760
    %2540 = vmatprep.mubr.f32.mxu0 %v2539
    %v2541 = vand.u32 %v1918, 4294901760
    %v2542 = vsub.f32 %v1918, %v2541
    %v2543 = vand.u32 %v2542, 4294901760
    %2544 = vmatmul.mubr.f32.gmra.mrb[0].mxu0 %v2543
    %v2545 = vpop.f32.mrb[0].mxu0
    %v2546 = vadd.f32 %v2438, %v2545
    %v2547 = vpop.f32.mrb[0].mxu0
    %2548 = vdwg.mxu0
    %2549 = vmatprep.subr.mxu0 0.0
    %v2550 = vand.u32 %v1920, 4294901760
    %v2551 = vsub.f32 %v1920, %v2550
    %v2552 = vand.u32 %v2551, 4294901760
    %2553 = vmatpush1.msra.mxu0 %v2552
    %2554 = vmatprep.subr.mxu0 0.0
    %v2555 = vand.u32 %v1921, 4294901760
    %v2556 = vsub.f32 %v1921, %v2555
    %v2557 = vand.u32 %v2556, 4294901760
    %2558 = vmatpush1.msra.mxu0 %v2557
    %2559 = vmatprep.subr.mxu0 0.0
    %v2560 = vand.u32 %v1922, 4294901760
    %v2561 = vsub.f32 %v1922, %v2560
    %v2562 = vand.u32 %v2561, 4294901760
    %2563 = vmatpush1.msra.mxu0 %v2562
    %2564 = vmatprep.subr.mxu0 0.0
    %v2565 = vand.u32 %v1923, 4294901760
    %v2566 = vsub.f32 %v1923, %v2565
    %v2567 = vand.u32 %v2566, 4294901760
    %2568 = vmatpush1.msra.mxu0 %v2567
    %2569 = vmatprep.subr.mxu0 0.0
    %v2570 = vand.u32 %v1924, 4294901760
    %v2571 = vsub.f32 %v1924, %v2570
    %v2572 = vand.u32 %v2571, 4294901760
    %2573 = vmatpush1.msra.mxu0 %v2572
    %2574 = vmatprep.subr.mxu0 0.0
    %v2575 = vand.u32 %v1925, 4294901760
    %v2576 = vsub.f32 %v1925, %v2575
    %v2577 = vand.u32 %v2576, 4294901760
    %2578 = vmatpush1.msra.mxu0 %v2577
    %2579 = vmatprep.subr.mxu0 0.0
    %v2580 = vand.u32 %v1926, 4294901760
    %v2581 = vsub.f32 %v1926, %v2580
    %v2582 = vand.u32 %v2581, 4294901760
    %2583 = vmatpush1.msra.mxu0 %v2582
    %2584 = vmatprep.subr.mxu0 0.0
    %v2585 = vand.u32 %v1927, 4294901760
    %v2586 = vsub.f32 %v1927, %v2585
    %v2587 = vand.u32 %v2586, 4294901760
    %2588 = vmatpush1.msra.mxu0 %v2587
    %2589 = vmatprep.subr.mxu0 0.0
    %v2590 = vand.u32 %v1928, 4294901760
    %v2591 = vsub.f32 %v1928, %v2590
    %v2592 = vand.u32 %v2591, 4294901760
    %2593 = vmatpush1.msra.mxu0 %v2592
    %2594 = vmatprep.subr.mxu0 0.0
    %v2595 = vand.u32 %v1929, 4294901760
    %v2596 = vsub.f32 %v1929, %v2595
    %v2597 = vand.u32 %v2596, 4294901760
    %2598 = vmatpush1.msra.mxu0 %v2597
    %2599 = vmatprep.subr.mxu0 0.0
    %v2600 = vand.u32 %v1930, 4294901760
    %v2601 = vsub.f32 %v1930, %v2600
    %v2602 = vand.u32 %v2601, 4294901760
    %2603 = vmatpush1.msra.mxu0 %v2602
    %2604 = vmatprep.subr.mxu0 0.0
    %v2605 = vand.u32 %v1931, 4294901760
    %v2606 = vsub.f32 %v1931, %v2605
    %v2607 = vand.u32 %v2606, 4294901760
    %2608 = vmatpush1.msra.mxu0 %v2607
    %2609 = vmatprep.subr.mxu0 0.0
    %v2610 = vand.u32 %v1932, 4294901760
    %v2611 = vsub.f32 %v1932, %v2610
    %v2612 = vand.u32 %v2611, 4294901760
    %2613 = vmatpush1.msra.mxu0 %v2612
    %2614 = vmatprep.subr.mxu0 0.0
    %v2615 = vand.u32 %v1933, 4294901760
    %v2616 = vsub.f32 %v1933, %v2615
    %v2617 = vand.u32 %v2616, 4294901760
    %2618 = vmatpush1.msra.mxu0 %v2617
    %2619 = vmatprep.subr.mxu0 0.0
    %v2620 = vand.u32 %v1934, 4294901760
    %v2621 = vsub.f32 %v1934, %v2620
    %v2622 = vand.u32 %v2621, 4294901760
    %2623 = vmatpush1.msra.mxu0 %v2622
    %2624 = vmatprep.subr.mxu0 0.0
    %v2625 = vand.u32 %v1935, 4294901760
    %v2626 = vsub.f32 %v1935, %v2625
    %v2627 = vand.u32 %v2626, 4294901760
    %2628 = vmatpush1.msra.mxu0 %v2627
    %2629 = vmatprep.subr.mxu0 0.0
    %v2630 = vand.u32 %v1936, 4294901760
    %v2631 = vsub.f32 %v1936, %v2630
    %v2632 = vand.u32 %v2631, 4294901760
    %2633 = vmatpush1.msra.mxu0 %v2632
    %2634 = vmatprep.subr.mxu0 0.0
    %v2635 = vand.u32 %v1937, 4294901760
    %v2636 = vsub.f32 %v1937, %v2635
    %v2637 = vand.u32 %v2636, 4294901760
    %2638 = vmatpush1.msra.mxu0 %v2637
    %2639 = vmatprep.subr.mxu0 0.0
    %v2640 = vand.u32 %v1938, 4294901760
    %v2641 = vsub.f32 %v1938, %v2640
    %v2642 = vand.u32 %v2641, 4294901760
    %2643 = vmatpush1.msra.mxu0 %v2642
    %2644 = vmatprep.subr.mxu0 0.0
    %v2645 = vand.u32 %v1939, 4294901760
    %v2646 = vsub.f32 %v1939, %v2645
    %v2647 = vand.u32 %v2646, 4294901760
    %2648 = vmatpush1.msra.mxu0 %v2647
    %2649 = vmatprep.subr.mxu0 0.0
    %v2650 = vand.u32 %v1940, 4294901760
    %v2651 = vsub.f32 %v1940, %v2650
    %v2652 = vand.u32 %v2651, 4294901760
    %2653 = vmatpush1.msra.mxu0 %v2652
    %2654 = vmatprep.subr.mxu0 0.0
    %v2655 = vand.u32 %v1941, 4294901760
    %v2656 = vsub.f32 %v1941, %v2655
    %v2657 = vand.u32 %v2656, 4294901760
    %2658 = vmatpush1.msra.mxu0 %v2657
    %2659 = vmatprep.subr.mxu0 0.0
    %v2660 = vand.u32 %v1942, 4294901760
    %v2661 = vsub.f32 %v1942, %v2660
    %v2662 = vand.u32 %v2661, 4294901760
    %2663 = vmatpush1.msra.mxu0 %v2662
    %2664 = vmatprep.subr.mxu0 0.0
    %v2665 = vand.u32 %v1943, 4294901760
    %v2666 = vsub.f32 %v1943, %v2665
    %v2667 = vand.u32 %v2666, 4294901760
    %2668 = vmatpush1.msra.mxu0 %v2667
    %2669 = vmatprep.subr.mxu0 0.0
    %v2670 = vand.u32 %v1944, 4294901760
    %v2671 = vsub.f32 %v1944, %v2670
    %v2672 = vand.u32 %v2671, 4294901760
    %2673 = vmatpush1.msra.mxu0 %v2672
    %2674 = vmatprep.subr.mxu0 0.0
    %v2675 = vand.u32 %v1945, 4294901760
    %v2676 = vsub.f32 %v1945, %v2675
    %v2677 = vand.u32 %v2676, 4294901760
    %2678 = vmatpush1.msra.mxu0 %v2677
    %2679 = vmatprep.subr.mxu0 0.0
    %v2680 = vand.u32 %v1946, 4294901760
    %v2681 = vsub.f32 %v1946, %v2680
    %v2682 = vand.u32 %v2681, 4294901760
    %2683 = vmatpush1.msra.mxu0 %v2682
    %2684 = vmatprep.subr.mxu0 0.0
    %v2685 = vand.u32 %v1947, 4294901760
    %v2686 = vsub.f32 %v1947, %v2685
    %v2687 = vand.u32 %v2686, 4294901760
    %2688 = vmatpush1.msra.mxu0 %v2687
    %2689 = vmatprep.subr.mxu0 0.0
    %v2690 = vand.u32 %v1948, 4294901760
    %v2691 = vsub.f32 %v1948, %v2690
    %v2692 = vand.u32 %v2691, 4294901760
    %2693 = vmatpush1.msra.mxu0 %v2692
    %2694 = vmatprep.subr.mxu0 0.0
    %v2695 = vand.u32 %v1949, 4294901760
    %v2696 = vsub.f32 %v1949, %v2695
    %v2697 = vand.u32 %v2696, 4294901760
    %2698 = vmatpush1.msra.mxu0 %v2697
    %2699 = vmatprep.subr.mxu0 0.0
    %v2700 = vand.u32 %v1950, 4294901760
    %v2701 = vsub.f32 %v1950, %v2700
    %v2702 = vand.u32 %v2701, 4294901760
    %2703 = vmatpush1.msra.mxu0 %v2702
    %2704 = vmatprep.subr.mxu0 0.0
    %v2705 = vand.u32 %v1951, 4294901760
    %v2706 = vsub.f32 %v1951, %v2705
    %v2707 = vand.u32 %v2706, 4294901760
    %2708 = vmatpush1.msra.mxu0 %v2707
    %v2709 = vand.u32 %v1919, 4294901760
    %2710 = vmatprep.mubr.f32.mxu0 %v2709
    %v2711 = vand.u32 %v1918, 4294901760
    %2712 = vmatmul.mubr.f32.gmra.mrb[0].mxu0 %v2711
    %v2713 = vpop.f32.mrb[0].mxu0
    %v2714 = vadd.f32 %v2546, %v2713
    %v2715 = vpop.f32.mrb[0].mxu0
    %2716 = vdwg.mxu0
    %2717 = vmatprep.subr.mxu0 0.0
    %v2718 = vand.u32 %v1920, 4294901760
    %2719 = vmatpush1.msra.mxu0 %v2718
    %2720 = vmatprep.subr.mxu0 0.0
    %v2721 = vand.u32 %v1921, 4294901760
    %2722 = vmatpush1.msra.mxu0 %v2721
    %2723 = vmatprep.subr.mxu0 0.0
    %v2724 = vand.u32 %v1922, 4294901760
    %2725 = vmatpush1.msra.mxu0 %v2724
    %2726 = vmatprep.subr.mxu0 0.0
    %v2727 = vand.u32 %v1923, 4294901760
    %2728 = vmatpush1.msra.mxu0 %v2727
    %2729 = vmatprep.subr.mxu0 0.0
    %v2730 = vand.u32 %v1924, 4294901760
    %2731 = vmatpush1.msra.mxu0 %v2730
    %2732 = vmatprep.subr.mxu0 0.0
    %v2733 = vand.u32 %v1925, 4294901760
    %2734 = vmatpush1.msra.mxu0 %v2733
    %2735 = vmatprep.subr.mxu0 0.0
    %v2736 = vand.u32 %v1926, 4294901760
    %2737 = vmatpush1.msra.mxu0 %v2736
    %2738 = vmatprep.subr.mxu0 0.0
    %v2739 = vand.u32 %v1927, 4294901760
    %2740 = vmatpush1.msra.mxu0 %v2739
    %2741 = vmatprep.subr.mxu0 0.0
    %v2742 = vand.u32 %v1928, 4294901760
    %2743 = vmatpush1.msra.mxu0 %v2742
    %2744 = vmatprep.subr.mxu0 0.0
    %v2745 = vand.u32 %v1929, 4294901760
    %2746 = vmatpush1.msra.mxu0 %v2745
    %2747 = vmatprep.subr.mxu0 0.0
    %v2748 = vand.u32 %v1930, 4294901760
    %2749 = vmatpush1.msra.mxu0 %v2748
    %2750 = vmatprep.subr.mxu0 0.0
    %v2751 = vand.u32 %v1931, 4294901760
    %2752 = vmatpush1.msra.mxu0 %v2751
    %2753 = vmatprep.subr.mxu0 0.0
    %v2754 = vand.u32 %v1932, 4294901760
    %2755 = vmatpush1.msra.mxu0 %v2754
    %2756 = vmatprep.subr.mxu0 0.0
    %v2757 = vand.u32 %v1933, 4294901760
    %2758 = vmatpush1.msra.mxu0 %v2757
    %2759 = vmatprep.subr.mxu0 0.0
    %v2760 = vand.u32 %v1934, 4294901760
    %2761 = vmatpush1.msra.mxu0 %v2760
    %2762 = vmatprep.subr.mxu0 0.0
    %v2763 = vand.u32 %v1935, 4294901760
    %2764 = vmatpush1.msra.mxu0 %v2763
    %2765 = vmatprep.subr.mxu0 0.0
    %v2766 = vand.u32 %v1936, 4294901760
    %2767 = vmatpush1.msra.mxu0 %v2766
    %2768 = vmatprep.subr.mxu0 0.0
    %v2769 = vand.u32 %v1937, 4294901760
    %2770 = vmatpush1.msra.mxu0 %v2769
    %2771 = vmatprep.subr.mxu0 0.0
    %v2772 = vand.u32 %v1938, 4294901760
    %2773 = vmatpush1.msra.mxu0 %v2772
    %2774 = vmatprep.subr.mxu0 0.0
    %v2775 = vand.u32 %v1939, 4294901760
    %2776 = vmatpush1.msra.mxu0 %v2775
    %2777 = vmatprep.subr.mxu0 0.0
    %v2778 = vand.u32 %v1940, 4294901760
    %2779 = vmatpush1.msra.mxu0 %v2778
    %2780 = vmatprep.subr.mxu0 0.0
    %v2781 = vand.u32 %v1941, 4294901760
    %2782 = vmatpush1.msra.mxu0 %v2781
    %2783 = vmatprep.subr.mxu0 0.0
    %v2784 = vand.u32 %v1942, 4294901760
    %2785 = vmatpush1.msra.mxu0 %v2784
    %2786 = vmatprep.subr.mxu0 0.0
    %v2787 = vand.u32 %v1943, 4294901760
    %2788 = vmatpush1.msra.mxu0 %v2787
    %2789 = vmatprep.subr.mxu0 0.0
    %v2790 = vand.u32 %v1944, 4294901760
    %2791 = vmatpush1.msra.mxu0 %v2790
    %2792 = vmatprep.subr.mxu0 0.0
    %v2793 = vand.u32 %v1945, 4294901760
    %2794 = vmatpush1.msra.mxu0 %v2793
    %2795 = vmatprep.subr.mxu0 0.0
    %v2796 = vand.u32 %v1946, 4294901760
    %2797 = vmatpush1.msra.mxu0 %v2796
    %2798 = vmatprep.subr.mxu0 0.0
    %v2799 = vand.u32 %v1947, 4294901760
    %2800 = vmatpush1.msra.mxu0 %v2799
    %2801 = vmatprep.subr.mxu0 0.0
    %v2802 = vand.u32 %v1948, 4294901760
    %2803 = vmatpush1.msra.mxu0 %v2802
    %2804 = vmatprep.subr.mxu0 0.0
    %v2805 = vand.u32 %v1949, 4294901760
    %2806 = vmatpush1.msra.mxu0 %v2805
    %2807 = vmatprep.subr.mxu0 0.0
    %v2808 = vand.u32 %v1950, 4294901760
    %2809 = vmatpush1.msra.mxu0 %v2808
    %2810 = vmatprep.subr.mxu0 0.0
    %v2811 = vand.u32 %v1951, 4294901760
    %2812 = vmatpush1.msra.mxu0 %v2811
    %v2813 = vand.u32 %v1919, 4294901760
    %2814 = vmatprep.mubr.f32.mxu0 %v2813
    %v2815 = vand.u32 %v1918, 4294901760
    %2816 = vmatmul.mubr.f32.gmra.mrb[0].mxu0 %v2815
    %v2817 = vpop.f32.mrb[0].mxu0
    %v2818 = vadd.f32 %v2714, %v2817
    %v2819 = vpop.f32.mrb[0].mxu0
    %2820 = vdwg.mxu0
    %v2821 = vtanh.pop %v2818
    %vm2822 = vcmask 31744
    %2823 = vst.msk [vmem:[%s7] sm:$0xff] %vm2822, %v2821
    // Predicated region
    $region34: #{tpu_custom_call.1} parent=1 // pred_check
      _
    $region35: #{tpu_custom_call.1} parent=1 // pred_check_branch
      %2825 = sbr.rel (0) target = $region37
    $region36: #{tpu_custom_call.1} parent=1 // pred_region
      _
    $region37: #{tpu_custom_call.1} parent=1 // pred_fallthru
      _
    // Predicated region
    $region38: #{tpu_custom_call.1} parent=1 // pred_check
      _
    $region39: #{tpu_custom_call.1} parent=1 // pred_check_branch
      %2827 = sbr.rel (0) target = $region41
    $region40: #{tpu_custom_call.1} parent=1 // pred_region
      _
    $region41: #{tpu_custom_call.1} parent=1 // pred_fallthru
      _
    %2828 = vsyncpa [#allocation3], 1

</llo_original>
